<compile_context>
chip_gen: v7x
topology: tpu7x:2x2x1
jax: 0.10.0
libtpu: 0.0.40
codegen_flags: <defaults>
</compile_context>

<pallas_src>
import numpy as np
import jax
import jax.numpy as jnp
from jax.experimental import pallas as pl
from jax.experimental.pallas import tpu as pltpu


def _round_up(x, m):
    return ((x + m - 1) // m) * m


def _conv_as_matmul(w_hwio, in_row_stride, in_col_stride, in_lanes,
                    n_out_h, n_out_w, out_h_stride=1, out_w_stride=1,
                    out_h_off=0, out_w_off=0):
    """Lower a VALID conv to a dense (in_lanes, out_lanes) matrix.

    The input feature map is flattened on the lane axis as
      lane(ih, iw, cin) = ih*in_row_stride + iw*in_col_stride + cin
    and output lanes are (oh, ow, cout) row-major, so
      features_2d @ result  ==  conv(features) (+ optional output stride/offset).
    Entries off the conv taps are zero.
    """
    KH, KW, Cin, Cout = w_hwio.shape
    oh, ow, kh, kw, ci, co = np.indices((n_out_h, n_out_w, KH, KW, Cin, Cout))
    ih = out_h_off + out_h_stride * oh + kh
    iw = out_w_off + out_w_stride * ow + kw
    rows = ih * in_row_stride + iw * in_col_stride + ci
    cols = (oh * n_out_w + ow) * Cout + co
    vals = jnp.asarray(w_hwio, jnp.float32)[kh, kw, ci, co]
    big = jnp.zeros((in_lanes, n_out_h * n_out_w * Cout), jnp.float32)
    return big.at[rows.ravel(), cols.ravel()].set(vals.reshape(-1))


def cnn_value_fn_kernel(x_ref, w1_ref, w2_ref, w3_ref, c_ref, out_ref):
    # c_ref layout (f32, (8,144)):
    #   row 0: b1 tiled over the 9 pooled positions (144)
    #   row 1: b2 tiled over the 4 conv2 positions  (128, zero-padded)
    #   row 2: b3                                    (64, zero-padded)
    #   row 3: decoder weight wd                     (64, zero-padded)
    #   row 4, lane 0: decoder bias bd
    x = x_ref[...]                                                # (TB,147) bf16

    # conv1 fused with the 2x2/stride-2 maxpool: ONE matmul whose N axis
    # concatenates the four pool offsets.  max(relu(s+b)) == relu(max(s)+b)
    # because relu is monotone and the bias is shared across the offsets.
    s = jnp.dot(x, w1_ref[...], preferred_element_type=jnp.float32)  # (TB,576)
    pooled = jnp.maximum(jnp.maximum(s[:, 0:144], s[:, 144:288]),
                         jnp.maximum(s[:, 288:432], s[:, 432:576]))
    pooled = jnp.maximum(pooled + c_ref[0:1, :], 0.0)             # (TB,144) f32

    # conv2: (3,3,16) -> (2,2,32) + ReLU, as (TB,144) @ (144,128)
    y2 = jnp.dot(pooled.astype(jnp.bfloat16), w2_ref[...],
                 preferred_element_type=jnp.float32)
    y2 = jnp.maximum(y2 + c_ref[1:2, :128], 0.0)                  # (TB,128) f32

    # conv3: (2,2,32) -> (1,1,64) + ReLU, as (TB,128) @ (128,64)
    y3 = jnp.dot(y2.astype(jnp.bfloat16), w3_ref[...],
                 preferred_element_type=jnp.float32)
    y3 = jnp.maximum(y3 + c_ref[2:3, :64], 0.0)                   # (TB,64)  f32

    # decoder Linear(64,1) on the VPU/XLU (no N=1 MXU pass).
    wd = c_ref[3:4, :64]                                          # (1,64)
    bd = c_ref[4:5, 0:1]                                          # (1,1)
    out_ref[...] = jnp.sum(y3 * wd, axis=-1, keepdims=True) + bd


def cnn_value_fn(x_nhwc, params, block_batch=1024):
    """x_nhwc: (B, 7, 7, 3) float32 -> (B, 1) state values."""
    w1, b1, w2, b2, w3, b3, wd, bd = params
    B = x_nhwc.shape[0]

    # ---- fold convolutions into dense bf16 matrices (weight-only prep) -----
    # conv1+pool: input lanes (ih,iw,c) -> strides (21, 3); output lanes
    # (ph,pw,c) of the *pooled* 3x3x16 map -> strides (48, 16).
    w1_offs = [_conv_as_matmul(w1, 21, 3, 147, 3, 3,
                               out_h_stride=2, out_w_stride=2,
                               out_h_off=dh, out_w_off=dw)
               for dh in range(2) for dw in range(2)]              # 4 x (147,144)
    w1_fused = jnp.concatenate(w1_offs, axis=1).astype(jnp.bfloat16)   # (147,576)
    w2_big = _conv_as_matmul(w2, 48, 16, 144, 2, 2).astype(jnp.bfloat16)  # (144,128)
    w3_big = _conv_as_matmul(w3, 64, 32, 128, 1, 1).astype(jnp.bfloat16)  # (128,64)

    consts = jnp.zeros((8, 144), jnp.float32)
    consts = consts.at[0, :].set(jnp.tile(b1.astype(jnp.float32), 9))
    consts = consts.at[1, :128].set(jnp.tile(b2.astype(jnp.float32), 4))
    consts = consts.at[2, :64].set(b3.astype(jnp.float32))
    consts = consts.at[3, :64].set(wd.astype(jnp.float32).reshape(-1))
    consts = consts.at[4, 0].set(bd.astype(jnp.float32).reshape(-1)[0])

    # ---- batch blocking -----------------------------------------------------
    B8 = _round_up(B, 8)
    TB = min(int(block_batch), B8)
    if B8 > 8:
        # ensure >= 2 batch blocks so ("parallel",) can use both v7x TCs
        TB = min(TB, _round_up((B8 + 1) // 2, 8))
    TB = max(TB, 8)
    B_pad = _round_up(B8, TB)
    nb = B_pad // TB

    x2d = x_nhwc.reshape(B, 147).astype(jnp.bfloat16)              # NHWC flatten
    if B_pad != B:
        x2d = jnp.pad(x2d, ((0, B_pad - B), (0, 0)))

    def full(shape):
        return pl.BlockSpec(shape, lambda b, _n=len(shape): (0,) * _n)

    grid_spec = pltpu.PrefetchScalarGridSpec(
        num_scalar_prefetch=0,
        grid=(nb,),
        in_specs=[
            pl.BlockSpec((TB, 147), lambda b: (b, 0)),             # images
            full((147, 576)),                                      # conv1 fused
            full((144, 128)),                                      # conv2
            full((128, 64)),                                       # conv3
            full((8, 144)),                                        # packed consts
        ],
        out_specs=pl.BlockSpec((TB, 1), lambda b: (b, 0)),
    )

    out = pl.pallas_call(
        cnn_value_fn_kernel,
        out_shape=jax.ShapeDtypeStruct((B_pad, 1), jnp.float32),
        grid_spec=grid_spec,
        compiler_params=pltpu.CompilerParams(
            dimension_semantics=("parallel",),
            vmem_limit_bytes=32 * 1024 * 1024),
    )(x2d, w1_fused, w2_big, w3_big, consts)
    return out[:B]


def init_params(key):
    """Deterministic PyTorch-default-style U(-1/sqrt(fan_in), +) init (HWIO)."""
    ks = jax.random.split(key, 8)

    def u(k, shape, fan_in):
        bound = 1.0 / (fan_in ** 0.5)
        return jax.random.uniform(k, shape, jnp.float32, -bound, bound)

    w1 = u(ks[0], (2, 2, 3, 16), 3 * 4)
    b1 = u(ks[1], (16,), 3 * 4)
    w2 = u(ks[2], (2, 2, 16, 32), 16 * 4)
    b2 = u(ks[3], (32,), 16 * 4)
    w3 = u(ks[4], (2, 2, 32, 64), 32 * 4)
    b3 = u(ks[5], (64,), 32 * 4)
    wd = u(ks[6], (64, 1), 64)
    bd = u(ks[7], (1,), 64)
    return (w1, b1, w2, b2, w3, b3, wd, bd)


def reference_forward(x, params):
    """Pure-JAX f32 reference matching the PyTorch forward semantics."""
    w1, b1, w2, b2, w3, b3, wd, bd = params
    dn = ("NHWC", "HWIO", "NHWC")
    y = jax.lax.conv_general_dilated(x, w1, (1, 1), "VALID",
                                     dimension_numbers=dn) + b1
    y = jax.nn.relu(y)
    y = jax.lax.reduce_window(y, -jnp.inf, jax.lax.max,
                              (1, 2, 2, 1), (1, 2, 2, 1), "VALID")
    y = jax.nn.relu(jax.lax.conv_general_dilated(y, w2, (1, 1), "VALID",
                                                 dimension_numbers=dn) + b2)
    y = jax.nn.relu(jax.lax.conv_general_dilated(y, w3, (1, 1), "VALID",
                                                 dimension_numbers=dn) + b3)
    y = y.reshape(y.shape[0], -1)
    return y @ wd + bd


if __name__ == "__main__":
    key = jax.random.PRNGKey(0)
    kx, kp = jax.random.split(key)
    B = 200
    x = jax.random.uniform(kx, (B, 7, 7, 3), jnp.float32)   # minigrid obs, NHWC
    params = init_params(kp)
    ref = reference_forward(x, params)

    # default path: TB capped to ceil(B8/2) -> 2 batch blocks (v7x both-TC)
    out1 = jax.block_until_ready(cnn_value_fn(x, params))
    # multi-block path: 4 grid steps of 64 + batch padding
    out2 = jax.block_until_ready(cnn_value_fn(x, params, block_batch=64))

    # bf16 matmuls with f32 accumulation -> loosened tolerance vs. f32 reference
    for out in (out1, out2):
        assert out.shape == (B, 1), out.shape
        if not jnp.allclose(out, ref, atol=3e-2, rtol=3e-2):
            raise AssertionError(
                f"Pallas/ref mismatch, max abs diff = {jnp.abs(out - ref).max()}")
    print("KERNEL_OK")
</pallas_src>

<mosaic_0001>
module attributes {stable_mosaic.version = 11 : i64} {
  func.func @cnn_value_fn_kernel(%arg0: i32, %arg1: memref<104x147xbf16, #tpu.memory_space<vmem>>, %arg2: memref<147x576xbf16, #tpu.memory_space<vmem>>, %arg3: memref<144x128xbf16, #tpu.memory_space<vmem>>, %arg4: memref<128x64xbf16, #tpu.memory_space<vmem>>, %arg5: memref<8x144xf32, #tpu.memory_space<vmem>>, %arg6: memref<104x1xf32, #tpu.memory_space<vmem>>) attributes {dimension_semantics = [#tpu.dimension_semantics<parallel>], iteration_bounds = array<i64: 2>, scalar_prefetch = 0 : i64, scratch_operands = 0 : i64, tpu.core_type = #tpu.core_type<tc>, window_params = [{transform_indices = @transform_0, window_bounds = array<i64: 104, 147>}, {pipeline_mode = #tpu.pipeline_mode<synchronous>, transform_indices = @transform_1, window_bounds = array<i64: 147, 576>}, {pipeline_mode = #tpu.pipeline_mode<synchronous>, transform_indices = @transform_2, window_bounds = array<i64: 144, 128>}, {pipeline_mode = #tpu.pipeline_mode<synchronous>, transform_indices = @transform_3, window_bounds = array<i64: 128, 64>}, {pipeline_mode = #tpu.pipeline_mode<synchronous>, transform_indices = @transform_4, window_bounds = array<i64: 8, 144>}, {transform_indices = @transform_5, window_bounds = array<i64: 104, 1>}]} {
    %c0 = arith.constant 0 : index
    %c0_0 = arith.constant 0 : index
    %0 = vector.load %arg1[%c0, %c0_0] : memref<104x147xbf16, #tpu.memory_space<vmem>>, vector<104x147xbf16>
    %c0_1 = arith.constant 0 : index
    %c0_2 = arith.constant 0 : index
    %1 = vector.load %arg2[%c0_1, %c0_2] : memref<147x576xbf16, #tpu.memory_space<vmem>>, vector<147x576xbf16>
    %cst = arith.constant dense<0.000000e+00> : vector<104x576xf32>
    %2 = tpu.matmul %0, %1, %cst {dimension_numbers = #tpu.dot_dimension_numbers<[1], [0], [0], [1], [0, 0, 1, 1], [], []>} : vector<104x147xbf16>, vector<147x576xbf16>, vector<104x576xf32> -> vector<104x576xf32>
    %3 = vector.extract_strided_slice %2 {offsets = [0, 0], sizes = [104, 144], strides = [1, 1]} : vector<104x576xf32> to vector<104x144xf32>
    %4 = vector.extract_strided_slice %2 {offsets = [0, 144], sizes = [104, 144], strides = [1, 1]} : vector<104x576xf32> to vector<104x144xf32>
    %5 = arith.maximumf %3, %4 : vector<104x144xf32>
    %6 = vector.extract_strided_slice %2 {offsets = [0, 288], sizes = [104, 144], strides = [1, 1]} : vector<104x576xf32> to vector<104x144xf32>
    %7 = vector.extract_strided_slice %2 {offsets = [0, 432], sizes = [104, 144], strides = [1, 1]} : vector<104x576xf32> to vector<104x144xf32>
    %8 = arith.maximumf %6, %7 : vector<104x144xf32>
    %9 = arith.maximumf %5, %8 : vector<104x144xf32>
    %c0_3 = arith.constant 0 : index
    %c0_4 = arith.constant 0 : index
    %10 = vector.load %arg5[%c0_3, %c0_4] : memref<8x144xf32, #tpu.memory_space<vmem>>, vector<1x144xf32>
    %11 = vector.broadcast %10 : vector<1x144xf32> to vector<104x144xf32>
    %12 = arith.addf %9, %11 : vector<104x144xf32>
    %cst_5 = arith.constant 0.000000e+00 : f32
    %13 = vector.broadcast %cst_5 : f32 to vector<104x144xf32>
    %14 = arith.maximumf %12, %13 : vector<104x144xf32>
    %15 = arith.truncf %14 : vector<104x144xf32> to vector<104x144xbf16>
    %c0_6 = arith.constant 0 : index
    %c0_7 = arith.constant 0 : index
    %16 = vector.load %arg3[%c0_6, %c0_7] : memref<144x128xbf16, #tpu.memory_space<vmem>>, vector<144x128xbf16>
    %cst_8 = arith.constant dense<0.000000e+00> : vector<104x128xf32>
    %17 = tpu.matmul %15, %16, %cst_8 {dimension_numbers = #tpu.dot_dimension_numbers<[1], [0], [0], [1], [0, 0, 1, 1], [], []>} : vector<104x144xbf16>, vector<144x128xbf16>, vector<104x128xf32> -> vector<104x128xf32>
    %c1 = arith.constant 1 : index
    %c0_9 = arith.constant 0 : index
    %18 = vector.load %arg5[%c1, %c0_9] : memref<8x144xf32, #tpu.memory_space<vmem>>, vector<1x128xf32>
    %19 = vector.broadcast %18 : vector<1x128xf32> to vector<104x128xf32>
    %20 = arith.addf %17, %19 : vector<104x128xf32>
    %cst_10 = arith.constant 0.000000e+00 : f32
    %21 = vector.broadcast %cst_10 : f32 to vector<104x128xf32>
    %22 = arith.maximumf %20, %21 : vector<104x128xf32>
    %23 = arith.truncf %22 : vector<104x128xf32> to vector<104x128xbf16>
    %c0_11 = arith.constant 0 : index
    %c0_12 = arith.constant 0 : index
    %24 = vector.load %arg4[%c0_11, %c0_12] : memref<128x64xbf16, #tpu.memory_space<vmem>>, vector<128x64xbf16>
    %cst_13 = arith.constant dense<0.000000e+00> : vector<104x64xf32>
    %25 = tpu.matmul %23, %24, %cst_13 {dimension_numbers = #tpu.dot_dimension_numbers<[1], [0], [0], [1], [0, 0, 1, 1], [], []>} : vector<104x128xbf16>, vector<128x64xbf16>, vector<104x64xf32> -> vector<104x64xf32>
    %c2 = arith.constant 2 : index
    %c0_14 = arith.constant 0 : index
    %26 = vector.load %arg5[%c2, %c0_14] : memref<8x144xf32, #tpu.memory_space<vmem>>, vector<1x64xf32>
    %27 = vector.broadcast %26 : vector<1x64xf32> to vector<104x64xf32>
    %28 = arith.addf %25, %27 : vector<104x64xf32>
    %cst_15 = arith.constant 0.000000e+00 : f32
    %29 = vector.broadcast %cst_15 : f32 to vector<104x64xf32>
    %30 = arith.maximumf %28, %29 : vector<104x64xf32>
    %c3 = arith.constant 3 : index
    %c0_16 = arith.constant 0 : index
    %31 = vector.load %arg5[%c3, %c0_16] : memref<8x144xf32, #tpu.memory_space<vmem>>, vector<1x64xf32>
    %c4 = arith.constant 4 : index
    %c0_17 = arith.constant 0 : index
    %32 = vector.load %arg5[%c4, %c0_17] : memref<8x144xf32, #tpu.memory_space<vmem>>, vector<1x1xf32>
    %33 = vector.broadcast %31 : vector<1x64xf32> to vector<104x64xf32>
    %34 = arith.mulf %30, %33 : vector<104x64xf32>
    %cst_18 = arith.constant dense<0.000000e+00> : vector<104xf32>
    %35 = vector.multi_reduction <add>, %34, %cst_18 [1] : vector<104x64xf32> to vector<104xf32>
    %36 = vector.shape_cast %35 : vector<104xf32> to vector<104x1xf32>
    %37 = vector.broadcast %32 : vector<1x1xf32> to vector<104x1xf32>
    %38 = arith.addf %36, %37 : vector<104x1xf32>
    %c0_19 = arith.constant 0 : index
    %c0_20 = arith.constant 0 : index
    %39 = vector.load %arg6[%c0_19, %c0_20] : memref<104x1xf32, #tpu.memory_space<vmem>>, vector<104x1xf32>
    tpu.vector_store %arg6[%c0_19, %c0_20], %38 {strides = array<i32>} : memref<104x1xf32, #tpu.memory_space<vmem>>, vector<104x1xf32>,
    return
  }
  func.func @transform_0(%arg0: i32) -> (i32, i32) {
    %c0_i32 = arith.constant 0 : i32
    %c0_i32_0 = arith.constant 0 : i32
    return %arg0, %c0_i32 : i32, i32
  }
  func.func @transform_1(%arg0: i32) -> (i32, i32) {
    %c0_i32 = arith.constant 0 : i32
    %c0_i32_0 = arith.constant 0 : i32
    %c0_i32_1 = arith.constant 0 : i32
    return %c0_i32, %c0_i32_0 : i32, i32
  }
  func.func @transform_2(%arg0: i32) -> (i32, i32) {
    %c0_i32 = arith.constant 0 : i32
    %c0_i32_0 = arith.constant 0 : i32
    %c0_i32_1 = arith.constant 0 : i32
    return %c0_i32, %c0_i32_0 : i32, i32
  }
  func.func @transform_3(%arg0: i32) -> (i32, i32) {
    %c0_i32 = arith.constant 0 : i32
    %c0_i32_0 = arith.constant 0 : i32
    %c0_i32_1 = arith.constant 0 : i32
    return %c0_i32, %c0_i32_0 : i32, i32
  }
  func.func @transform_4(%arg0: i32) -> (i32, i32) {
    %c0_i32 = arith.constant 0 : i32
    %c0_i32_0 = arith.constant 0 : i32
    %c0_i32_1 = arith.constant 0 : i32
    return %c0_i32, %c0_i32_0 : i32, i32
  }
  func.func @transform_5(%arg0: i32) -> (i32, i32) {
    %c0_i32 = arith.constant 0 : i32
    %c0_i32_0 = arith.constant 0 : i32
    return %arg0, %c0_i32 : i32, i32
  }
}

</mosaic_0001>

<llo_original>
// kernel: tpu_custom_call.1
$region0: #{tpu_custom_call.1}
  #allocation0 [shape = 'u32[]', space=smem, size = 0x4, offset = 0x4, fixed_abs, tag = 'smem constant byte address 0x4 - core index']
  #allocation1 [shape = 'u32[144,128]{1,0:T(1,128)}', space=vmem, size = 0x12000, scoped, tag = 'internal scratch']
  %s0 = inlined_call_operand.vmem [shape: bf16[208,147], index: 0, kind: input, shape index: {}]
  %s1 = inlined_call_operand.vmem [shape: bf16[147,576], index: 1, kind: input, shape index: {}]
  %s2 = inlined_call_operand.vmem [shape: bf16[144,128], index: 2, kind: input, shape index: {}]
  %s3 = inlined_call_operand.vmem [shape: bf16[128,64], index: 3, kind: input, shape index: {}]
  %s4 = inlined_call_operand.vmem [shape: f32[8,144], index: 4, kind: input, shape index: {}]
  %s5 = inlined_call_operand.vmem [shape: f32[208,1], index: 5, kind: output, shape index: {}]
  %s6 = sld [smem:[#allocation0]]
  $region53: #{tpu_custom_call.1} parent=0
    _
  %s8 = ssub.s32 1, %s6
  %s9 = scalar_select 0, %s8, %s6
  loop: start=0, step=1, limit=4
  $region2: #{tpu_custom_call.1} parent=0 // loop_pre_header
    _
  $region3: #{tpu_custom_call.1} parent=0 // loop_header
    %s11 = sphi 0, %s15
    %p12 = scmp.ge.s32.totalorder %s11, 4
    %s21 = sphi 0, %s23
    %s24 = sphi 0, %s21
    %s25 = sphi 0, %s24
    %s41 = sphi 0, %s25
    %s45 = sphi 0, %s45
    %s47 = sphi 0, %s45
    %s48 = sphi 0, %s47
    %s62 = sphi 0, %s48
    %s66 = sphi 0, %s66
    %s68 = sphi 0, %s66
    %s69 = sphi 0, %s68
    %s83 = sphi 0, %s69
    %s87 = sphi 0, %s87
    %s89 = sphi 0, %s87
    %s90 = sphi 0, %s89
    %s104 = sphi 0, %s90
    %s108 = sphi 0, %s108
    %s110 = sphi 0, %s108
    %s111 = sphi 0, %s110
    %s125 = sphi 0, %s111
    %s131 = sphi 0, %s133
    %s134 = sphi 0, %s131
    %s135 = sphi 0, %s134
    %s151 = sphi 0, %s135
  $region4: #{tpu_custom_call.1} parent=0 // loop_header_branch
    %14 = sbr.rel (%p12) target = $region8
  $region5: #{tpu_custom_call.1} parent=0 // loop_body
    %s16 = ssub.s32 %s11, 1
    %s17 = ssub.s32 %s11, 2
    %s18 = sadd.s32 %s11, 1
    %s19 = ssub.s32 %s11, %s18
    %p20 = scmp.eq.s32.totalorder %s19, 0
    %s22 = sadd.s32 %s21, 1
    %s23 = scalar_select %p20, %s21, %s22
    %p26 = pneg %p20
    %p27 = scmp.eq.s32.totalorder %s11, 1
    %p28 = por %p26, %p27
    %p29 = scmp.ne.s32.totalorder %s21, %s24
    %p30 = scmp.eq.s32.totalorder %s11, 0
    %p31 = por %p29, %p30
    %p32 = scmp.ne.s32.totalorder %s21, %s24
    %p33 = scmp.eq.s32.totalorder %s16, 1
    %p34 = por %p32, %p33
    %p35 = scmp.ne.s32.totalorder %s24, %s25
    %p36 = scmp.eq.s32.totalorder %s16, 0
    %p37 = por %p35, %p36
    %p38 = scmp.ne.s32.totalorder %s24, %s25
    %p39 = scmp.eq.s32.totalorder %s17, 1
    %p40 = por %p38, %p39
    %p42 = scmp.ne.s32.totalorder %s25, %s41
    %p43 = scmp.eq.s32.totalorder %s17, 0
    %p44 = por %p42, %p43
    %s46 = sadd.s32 %s45, 1
    %p49 = scmp.eq.s32.totalorder %s11, 1
    %p50 = scmp.ne.s32.totalorder %s45, %s47
    %p51 = scmp.eq.s32.totalorder %s11, 0
    %p52 = por %p50, %p51
    %p53 = scmp.ne.s32.totalorder %s45, %s47
    %p54 = scmp.eq.s32.totalorder %s16, 1
    %p55 = por %p53, %p54
    %p56 = scmp.ne.s32.totalorder %s47, %s48
    %p57 = scmp.eq.s32.totalorder %s16, 0
    %p58 = por %p56, %p57
    %p59 = scmp.ne.s32.totalorder %s47, %s48
    %p60 = scmp.eq.s32.totalorder %s17, 1
    %p61 = por %p59, %p60
    %p63 = scmp.ne.s32.totalorder %s48, %s62
    %p64 = scmp.eq.s32.totalorder %s17, 0
    %p65 = por %p63, %p64
    %s67 = sadd.s32 %s66, 1
    %p70 = scmp.eq.s32.totalorder %s11, 1
    %p71 = scmp.ne.s32.totalorder %s66, %s68
    %p72 = scmp.eq.s32.totalorder %s11, 0
    %p73 = por %p71, %p72
    %p74 = scmp.ne.s32.totalorder %s66, %s68
    %p75 = scmp.eq.s32.totalorder %s16, 1
    %p76 = por %p74, %p75
    %p77 = scmp.ne.s32.totalorder %s68, %s69
    %p78 = scmp.eq.s32.totalorder %s16, 0
    %p79 = por %p77, %p78
    %p80 = scmp.ne.s32.totalorder %s68, %s69
    %p81 = scmp.eq.s32.totalorder %s17, 1
    %p82 = por %p80, %p81
    %p84 = scmp.ne.s32.totalorder %s69, %s83
    %p85 = scmp.eq.s32.totalorder %s17, 0
    %p86 = por %p84, %p85
    %s88 = sadd.s32 %s87, 1
    %p91 = scmp.eq.s32.totalorder %s11, 1
    %p92 = scmp.ne.s32.totalorder %s87, %s89
    %p93 = scmp.eq.s32.totalorder %s11, 0
    %p94 = por %p92, %p93
    %p95 = scmp.ne.s32.totalorder %s87, %s89
    %p96 = scmp.eq.s32.totalorder %s16, 1
    %p97 = por %p95, %p96
    %p98 = scmp.ne.s32.totalorder %s89, %s90
    %p99 = scmp.eq.s32.totalorder %s16, 0
    %p100 = por %p98, %p99
    %p101 = scmp.ne.s32.totalorder %s89, %s90
    %p102 = scmp.eq.s32.totalorder %s17, 1
    %p103 = por %p101, %p102
    %p105 = scmp.ne.s32.totalorder %s90, %s104
    %p106 = scmp.eq.s32.totalorder %s17, 0
    %p107 = por %p105, %p106
    %s109 = sadd.s32 %s108, 1
    %p112 = scmp.eq.s32.totalorder %s11, 1
    %p113 = scmp.ne.s32.totalorder %s108, %s110
    %p114 = scmp.eq.s32.totalorder %s11, 0
    %p115 = por %p113, %p114
    %p116 = scmp.ne.s32.totalorder %s108, %s110
    %p117 = scmp.eq.s32.totalorder %s16, 1
    %p118 = por %p116, %p117
    %p119 = scmp.ne.s32.totalorder %s110, %s111
    %p120 = scmp.eq.s32.totalorder %s16, 0
    %p121 = por %p119, %p120
    %p122 = scmp.ne.s32.totalorder %s110, %s111
    %p123 = scmp.eq.s32.totalorder %s17, 1
    %p124 = por %p122, %p123
    %p126 = scmp.ne.s32.totalorder %s111, %s125
    %p127 = scmp.eq.s32.totalorder %s17, 0
    %p128 = por %p126, %p127
    %s129 = ssub.s32 %s11, %s18
    %p130 = scmp.eq.s32.totalorder %s129, 0
    %s132 = sadd.s32 %s131, 1
    %s133 = scalar_select %p130, %s131, %s132
    %p136 = pneg %p130
    %p137 = scmp.eq.s32.totalorder %s11, 1
    %p138 = por %p136, %p137
    %p139 = scmp.ne.s32.totalorder %s131, %s134
    %p140 = scmp.eq.s32.totalorder %s11, 0
    %p141 = por %p139, %p140
    %p142 = scmp.ne.s32.totalorder %s131, %s134
    %p143 = scmp.eq.s32.totalorder %s16, 1
    %p144 = por %p142, %p143
    %p145 = scmp.ne.s32.totalorder %s134, %s135
    %p146 = scmp.eq.s32.totalorder %s16, 0
    %p147 = por %p145, %p146
    %p148 = scmp.ne.s32.totalorder %s134, %s135
    %p149 = scmp.eq.s32.totalorder %s17, 1
    %p150 = por %p148, %p149
    %p152 = scmp.ne.s32.totalorder %s135, %s151
    %p153 = scmp.eq.s32.totalorder %s17, 0
    %p154 = por %p152, %p153
    %p155 = scmp.le.s32.totalorder 1, %s11
    %p156 = scmp.lt.s32.totalorder %s11, 3
    %p157 = pnand %p155, %p156
    %p158 = pneg %p157
    // Predicated region
    $region9: #{tpu_custom_call.1} parent=5 // pred_check
      _
    $region10: #{tpu_custom_call.1} parent=5 // pred_check_branch
      %160 = sbr.rel (%p157) target = $region12
    $region11: #{tpu_custom_call.1} parent=5 // pred_region
      %s161 = ssub.s32 %s11, 1
      // Predicated region
      $region13: #{tpu_custom_call.1} parent=11 // pred_check
        %p162 = pneg %p58
      $region14: #{tpu_custom_call.1} parent=11 // pred_check_branch
        %164 = sbr.rel (%p162) target = $region16
      $region15: #{tpu_custom_call.1} parent=11 // pred_region
        _
      $region16: #{tpu_custom_call.1} parent=11 // pred_fallthru
        _
      // Predicated region
      $region17: #{tpu_custom_call.1} parent=11 // pred_check
        %p165 = pneg %p79
      $region18: #{tpu_custom_call.1} parent=11 // pred_check_branch
        %167 = sbr.rel (%p165) target = $region20
      $region19: #{tpu_custom_call.1} parent=11 // pred_region
        _
      $region20: #{tpu_custom_call.1} parent=11 // pred_fallthru
        _
      // Predicated region
      $region21: #{tpu_custom_call.1} parent=11 // pred_check
        %p168 = pneg %p100
      $region22: #{tpu_custom_call.1} parent=11 // pred_check_branch
        %170 = sbr.rel (%p168) target = $region24
      $region23: #{tpu_custom_call.1} parent=11 // pred_region
        _
      $region24: #{tpu_custom_call.1} parent=11 // pred_fallthru
        _
      // Predicated region
      $region25: #{tpu_custom_call.1} parent=11 // pred_check
        %p171 = pneg %p121
      $region26: #{tpu_custom_call.1} parent=11 // pred_check_branch
        %173 = sbr.rel (%p171) target = $region28
      $region27: #{tpu_custom_call.1} parent=11 // pred_region
        _
      $region28: #{tpu_custom_call.1} parent=11 // pred_fallthru
        _
    $region12: #{tpu_custom_call.1} parent=5 // pred_fallthru
      _
    %p174 = scmp.lt.s32.totalorder %s11, 2
    // Predicated region
    $region29: #{tpu_custom_call.1} parent=5 // pred_check
      %p175 = pneg %p174
    $region30: #{tpu_custom_call.1} parent=5 // pred_check_branch
      %177 = sbr.rel (%p175) target = $region32
    $region31: #{tpu_custom_call.1} parent=5 // pred_region
      // Predicated region
      $region33: #{tpu_custom_call.1} parent=31 // pred_check
        %p178 = pneg %p31
      $region34: #{tpu_custom_call.1} parent=31 // pred_check_branch
        %180 = sbr.rel (%p178) target = $region36
      $region35: #{tpu_custom_call.1} parent=31 // pred_region
        %s181 = smul.u32 13, %s11
        %p182 = scmp.lt.s32.totalorder %s181, 25
        %s183 = scalar_select %p182, %s181, 25
        %s184 = smul.addr %s183, 2
        %s185 = smul.addr %s184, 4
        %s186 = scalar_lea.vmem %s0, %s185
        %s187 = smul.u32 13, %s11
      $region36: #{tpu_custom_call.1} parent=31 // pred_fallthru
        _
    $region32: #{tpu_custom_call.1} parent=5 // pred_fallthru
      _
    %p188 = scmp.le.s32.totalorder 1, %s11
    %p189 = scmp.lt.s32.totalorder %s11, 3
    %p190 = pnand %p188, %p189
    %p191 = pneg %p190
    // Predicated region
    $region37: #{tpu_custom_call.1} parent=5 // pred_check
      _
    $region38: #{tpu_custom_call.1} parent=5 // pred_check_branch
      %193 = sbr.rel (%p190) target = $region40
    $region39: #{tpu_custom_call.1} parent=5 // pred_region
      %s194 = ssub.s32 %s11, 1
      %s195 = smul.u32 13, %s16
      %p196 = scmp.lt.s32.totalorder %s195, 25
      %s197 = scalar_select %p196, %s195, 25
      %s198 = smul.addr %s197, 2
      %s199 = smul.addr %s198, 4
      %s200 = scalar_lea.vmem %s0, %s199
      %p201 = pneg %p37
      %p202 = pneg %p34
      %p203 = pneg %p58
      %p204 = pneg %p55
      %p205 = pneg %p79
      %p206 = pneg %p76
      %p207 = pneg %p100
      %p208 = pneg %p97
      %p209 = pneg %p121
      %p210 = pneg %p118
      %p211 = pneg %p147
      %p212 = pneg %p144
      %s213 = smul.u32 13, %s16
      %p214 = scmp.lt.s32.totalorder %s213, 25
      %s215 = scalar_select %p214, %s213, 25
      %s216 = smul.addr %s215, 8
      %s217 = scalar_lea.vmem %s5, %s216
      %s218 = smul.u32 13, %s16
      %p219 = scmp.lt.s32.totalorder %s218, 25
      %s220 = scalar_select %p219, %s218, 25
      %s221 = smul.addr %s220, 2
      %s222 = smul.addr %s221, 4
      %s223 = scalar_lea.vmem %s0, %s222
      %s224 = smul.u32 13, %s16
      %s225 = smul.u32 13, %s16
      %p226 = scmp.lt.s32.totalorder %s225, 25
      %s227 = scalar_select %p226, %s225, 25
      %s228 = smul.addr %s227, 8
      %s229 = scalar_lea.vmem %s5, %s228
      %s230 = smul.u32 13, %s16
      %v232 = vld [vmem:[%s223] sm:$0xff]
      %v233 = vld [vmem:[%s223 + $0x8] sm:$0xff]
      %v234 = vld [vmem:[%s223 + $0x10] sm:$0xff]
      %v235 = vld [vmem:[%s223 + $0x18] sm:$0xff]
      %v236 = vld [vmem:[%s223 + $0x20] sm:$0xff]
      %v237 = vld [vmem:[%s223 + $0x28] sm:$0xff]
      %v238 = vld [vmem:[%s223 + $0x30] sm:$0xff]
      %v239 = vld [vmem:[%s223 + $0x38] sm:$0xff]
      %v240 = vld [vmem:[%s223 + $0x40] sm:$0xff]
      %v241 = vld [vmem:[%s223 + $0x48] sm:$0xff]
      %v242 = vld [vmem:[%s223 + $0x50] sm:$0xff]
      %v243 = vld [vmem:[%s223 + $0x58] sm:$0xff]
      %v244 = vld [vmem:[%s223 + $0x60] sm:$0xff]
      %v245 = vld [vmem:[%s1] sm:$0xff]
      %v246 = vld [vmem:[%s1 + $0x8] sm:$0xff]
      %v247 = vld [vmem:[%s1 + $0x10] sm:$0xf]
      %v248 = vld [vmem:[%s1 + $0x14] sm:$0xff]
      %v249 = vld [vmem:[%s1 + $0x1c] sm:$0xff]
      %v250 = vld [vmem:[%s1 + $0x24] sm:$0xf]
      %v251 = vld [vmem:[%s1 + $0x28] sm:$0xff]
      %v252 = vld [vmem:[%s1 + $0x30] sm:$0xff]
      %v253 = vld [vmem:[%s1 + $0x38] sm:$0xf]
      %v254 = vld [vmem:[%s1 + $0x3c] sm:$0xff]
      %v255 = vld [vmem:[%s1 + $0x44] sm:$0xff]
      %v256 = vld [vmem:[%s1 + $0x4c] sm:$0xf]
      %v257 = vld [vmem:[%s1 + $0x50] sm:$0xff]
      %v258 = vld [vmem:[%s1 + $0x58] sm:$0xff]
      %v259 = vld [vmem:[%s1 + $0x60] sm:$0xf]
      %v260 = vld [vmem:[%s1 + $0x64] sm:$0xff]
      %v261 = vld [vmem:[%s1 + $0x6c] sm:$0xff]
      %v262 = vld [vmem:[%s1 + $0x74] sm:$0xf]
      %v263 = vld [vmem:[%s1 + $0x78] sm:$0xff]
      %v264 = vld [vmem:[%s1 + $0x80] sm:$0xff]
      %v265 = vld [vmem:[%s1 + $0x88] sm:$0xf]
      %v266 = vld [vmem:[%s1 + $0x8c] sm:$0xff]
      %v267 = vld [vmem:[%s1 + $0x94] sm:$0xff]
      %v268 = vld [vmem:[%s1 + $0x9c] sm:$0xf]
      %v269 = vld [vmem:[%s1 + $0xa0] sm:$0xff]
      %v270 = vld [vmem:[%s1 + $0xa8] sm:$0xff]
      %v271 = vld [vmem:[%s1 + $0xb0] sm:$0xf]
      %v272 = vld [vmem:[%s1 + $0xb4] sm:$0xff]
      %v273 = vld [vmem:[%s1 + $0xbc] sm:$0xff]
      %v274 = vld [vmem:[%s1 + $0xc4] sm:$0xf]
      %v275 = vld [vmem:[%s1 + $0xc8] sm:$0xff]
      %v276 = vld [vmem:[%s1 + $0xd0] sm:$0xff]
      %v277 = vld [vmem:[%s1 + $0xd8] sm:$0xf]
      %v278 = vld [vmem:[%s1 + $0xdc] sm:$0xff]
      %v279 = vld [vmem:[%s1 + $0xe4] sm:$0xff]
      %v280 = vld [vmem:[%s1 + $0xec] sm:$0xf]
      %v281 = vld [vmem:[%s1 + $0xf0] sm:$0xff]
      %v282 = vld [vmem:[%s1 + $0xf8] sm:$0xff]
      %v283 = vld [vmem:[%s1 + $0x100] sm:$0xf]
      %v284 = vld [vmem:[%s1 + $0x104] sm:$0xff]
      %v285 = vld [vmem:[%s1 + $0x10c] sm:$0xff]
      %v286 = vld [vmem:[%s1 + $0x114] sm:$0xf]
      %v287 = vld [vmem:[%s1 + $0x118] sm:$0xff]
      %v288 = vld [vmem:[%s1 + $0x120] sm:$0xff]
      %v289 = vld [vmem:[%s1 + $0x128] sm:$0xf]
      %v290 = vld [vmem:[%s1 + $0x12c] sm:$0xff]
      %v291 = vld [vmem:[%s1 + $0x134] sm:$0xff]
      %v292 = vld [vmem:[%s1 + $0x13c] sm:$0xf]
      %v293 = vld [vmem:[%s1 + $0x140] sm:$0xff]
      %v294 = vld [vmem:[%s1 + $0x148] sm:$0xff]
      %v295 = vld [vmem:[%s1 + $0x150] sm:$0xf]
      %v296 = vld [vmem:[%s1 + $0x154] sm:$0xff]
      %v297 = vld [vmem:[%s1 + $0x15c] sm:$0xff]
      %v298 = vld [vmem:[%s1 + $0x164] sm:$0xf]
      %v299 = vld [vmem:[%s1 + $0x168] sm:$0x33]
      %v300 = vld [vmem:[%s1 + $0x170] sm:$0x33]
      %v301 = vld [vmem:[%s1 + $0x178] sm:$0x3]
      %v315 = vunpack.c.l.b16 %v232
      %v316 = vunpack.c.h.b16 %v232
      %v317 = vunpack.c.l.b16 %v233
      %v318 = vunpack.c.h.b16 %v233
      %v319 = vunpack.c.l.b16 %v234
      %v320 = vunpack.c.h.b16 %v234
      %v321 = vunpack.c.l.b16 %v235
      %v322 = vunpack.c.h.b16 %v235
      %v323 = vunpack.c.l.b16 %v236
      %v324 = vunpack.c.h.b16 %v236
      %v325 = vunpack.c.l.b16 %v237
      %v326 = vunpack.c.h.b16 %v237
      %v327 = vunpack.c.l.b16 %v238
      %v328 = vunpack.c.h.b16 %v238
      %v329 = vunpack.c.l.b16 %v239
      %v330 = vunpack.c.h.b16 %v239
      %v331 = vunpack.c.l.b16 %v240
      %v332 = vunpack.c.h.b16 %v240
      %v333 = vunpack.c.l.b16 %v241
      %v334 = vunpack.c.h.b16 %v241
      %v335 = vunpack.c.l.b16 %v242
      %v336 = vunpack.c.h.b16 %v242
      %v337 = vunpack.c.l.b16 %v243
      %v338 = vunpack.c.h.b16 %v243
      %v339 = vunpack.c.l.b16 %v244
      %v340 = vunpack.c.h.b16 %v244
      %v341 = vpack.c.b16 %v317, %v315
      %v342 = vpack.c.b16 %v318, %v316
      %v343 = vpack.c.b16 %v321, %v319
      %v344 = vpack.c.b16 %v322, %v320
      %v345 = vpack.c.b16 %v325, %v323
      %v346 = vpack.c.b16 %v326, %v324
      %v347 = vpack.c.b16 %v329, %v327
      %v348 = vpack.c.b16 %v330, %v328
      %v349 = vpack.c.b16 %v333, %v331
      %v350 = vpack.c.b16 %v334, %v332
      %v351 = vpack.c.b16 %v337, %v335
      %v352 = vpack.c.b16 %v338, %v336
      %v353 = vpack.c.b16 %v339, %v339
      %v354 = vpack.c.b16 %v340, %v340
      %v419 = vunpack.c.l.b16 %v245
      %v420 = vunpack.c.h.b16 %v245
      %v421 = vunpack.c.l.b16 %v246
      %v422 = vunpack.c.h.b16 %v246
      %v423 = vunpack.c.l.b16 %v247
      %v424 = vunpack.c.l.b16 %v248
      %v425 = vunpack.c.h.b16 %v248
      %v426 = vunpack.c.l.b16 %v249
      %v427 = vunpack.c.h.b16 %v249
      %v428 = vunpack.c.l.b16 %v250
      %v429 = vunpack.c.l.b16 %v251
      %v430 = vunpack.c.h.b16 %v251
      %v431 = vunpack.c.l.b16 %v252
      %v432 = vunpack.c.h.b16 %v252
      %v433 = vunpack.c.l.b16 %v253
      %v434 = vunpack.c.l.b16 %v254
      %v435 = vunpack.c.h.b16 %v254
      %v436 = vunpack.c.l.b16 %v255
      %v437 = vunpack.c.h.b16 %v255
      %v438 = vunpack.c.l.b16 %v256
      %v439 = vunpack.c.l.b16 %v257
      %v440 = vunpack.c.h.b16 %v257
      %v441 = vunpack.c.l.b16 %v258
      %v442 = vunpack.c.h.b16 %v258
      %v443 = vunpack.c.l.b16 %v259
      %v444 = vunpack.c.l.b16 %v260
      %v445 = vunpack.c.h.b16 %v260
      %v446 = vunpack.c.l.b16 %v261
      %v447 = vunpack.c.h.b16 %v261
      %v448 = vunpack.c.l.b16 %v262
      %v449 = vunpack.c.l.b16 %v263
      %v450 = vunpack.c.h.b16 %v263
      %v451 = vunpack.c.l.b16 %v264
      %v452 = vunpack.c.h.b16 %v264
      %v453 = vunpack.c.l.b16 %v265
      %v454 = vunpack.c.l.b16 %v266
      %v455 = vunpack.c.h.b16 %v266
      %v456 = vunpack.c.l.b16 %v267
      %v457 = vunpack.c.h.b16 %v267
      %v458 = vunpack.c.l.b16 %v268
      %v459 = vunpack.c.l.b16 %v269
      %v460 = vunpack.c.h.b16 %v269
      %v461 = vunpack.c.l.b16 %v270
      %v462 = vunpack.c.h.b16 %v270
      %v463 = vunpack.c.l.b16 %v271
      %v464 = vunpack.c.l.b16 %v272
      %v465 = vunpack.c.h.b16 %v272
      %v466 = vunpack.c.l.b16 %v273
      %v467 = vunpack.c.h.b16 %v273
      %v468 = vunpack.c.l.b16 %v274
      %v469 = vunpack.c.l.b16 %v275
      %v470 = vunpack.c.h.b16 %v275
      %v471 = vunpack.c.l.b16 %v276
      %v472 = vunpack.c.h.b16 %v276
      %v473 = vunpack.c.l.b16 %v277
      %v474 = vunpack.c.l.b16 %v278
      %v475 = vunpack.c.h.b16 %v278
      %v476 = vunpack.c.l.b16 %v279
      %v477 = vunpack.c.h.b16 %v279
      %v478 = vunpack.c.l.b16 %v280
      %v479 = vunpack.c.l.b16 %v281
      %v480 = vunpack.c.h.b16 %v281
      %v481 = vunpack.c.l.b16 %v282
      %v482 = vunpack.c.h.b16 %v282
      %v483 = vunpack.c.l.b16 %v283
      %v484 = vunpack.c.l.b16 %v284
      %v485 = vunpack.c.h.b16 %v284
      %v486 = vunpack.c.l.b16 %v285
      %v487 = vunpack.c.h.b16 %v285
      %v488 = vunpack.c.l.b16 %v286
      %v489 = vunpack.c.l.b16 %v287
      %v490 = vunpack.c.h.b16 %v287
      %v491 = vunpack.c.l.b16 %v288
      %v492 = vunpack.c.h.b16 %v288
      %v493 = vunpack.c.l.b16 %v289
      %v494 = vunpack.c.l.b16 %v290
      %v495 = vunpack.c.h.b16 %v290
      %v496 = vunpack.c.l.b16 %v291
      %v497 = vunpack.c.h.b16 %v291
      %v498 = vunpack.c.l.b16 %v292
      %v499 = vunpack.c.l.b16 %v293
      %v500 = vunpack.c.h.b16 %v293
      %v501 = vunpack.c.l.b16 %v294
      %v502 = vunpack.c.h.b16 %v294
      %v503 = vunpack.c.l.b16 %v295
      %v504 = vunpack.c.l.b16 %v296
      %v505 = vunpack.c.h.b16 %v296
      %v506 = vunpack.c.l.b16 %v297
      %v507 = vunpack.c.h.b16 %v297
      %v508 = vunpack.c.l.b16 %v298
      %v509 = vunpack.c.l.b16 %v299
      %v510 = vunpack.c.h.b16 %v299
      %v511 = vunpack.c.l.b16 %v300
      %v512 = vunpack.c.h.b16 %v300
      %v513 = vunpack.c.l.b16 %v301
      %v514 = vpack.c.b16 %v424, %v419
      %v515 = vpack.c.b16 %v425, %v420
      %v516 = vpack.c.b16 %v426, %v421
      %v517 = vpack.c.b16 %v427, %v422
      %v518 = vpack.c.b16 %v428, %v423
      %v519 = vpack.c.b16 %v434, %v429
      %v520 = vpack.c.b16 %v435, %v430
      %v521 = vpack.c.b16 %v436, %v431
      %v522 = vpack.c.b16 %v437, %v432
      %v523 = vpack.c.b16 %v438, %v433
      %v524 = vpack.c.b16 %v444, %v439
      %v525 = vpack.c.b16 %v445, %v440
      %v526 = vpack.c.b16 %v446, %v441
      %v527 = vpack.c.b16 %v447, %v442
      %v528 = vpack.c.b16 %v448, %v443
      %v529 = vpack.c.b16 %v454, %v449
      %v530 = vpack.c.b16 %v455, %v450
      %v531 = vpack.c.b16 %v456, %v451
      %v532 = vpack.c.b16 %v457, %v452
      %v533 = vpack.c.b16 %v458, %v453
      %v534 = vpack.c.b16 %v464, %v459
      %v535 = vpack.c.b16 %v465, %v460
      %v536 = vpack.c.b16 %v466, %v461
      %v537 = vpack.c.b16 %v467, %v462
      %v538 = vpack.c.b16 %v468, %v463
      %v539 = vpack.c.b16 %v474, %v469
      %v540 = vpack.c.b16 %v475, %v470
      %v541 = vpack.c.b16 %v476, %v471
      %v542 = vpack.c.b16 %v477, %v472
      %v543 = vpack.c.b16 %v478, %v473
      %v544 = vpack.c.b16 %v484, %v479
      %v545 = vpack.c.b16 %v485, %v480
      %v546 = vpack.c.b16 %v486, %v481
      %v547 = vpack.c.b16 %v487, %v482
      %v548 = vpack.c.b16 %v488, %v483
      %v549 = vpack.c.b16 %v494, %v489
      %v550 = vpack.c.b16 %v495, %v490
      %v551 = vpack.c.b16 %v496, %v491
      %v552 = vpack.c.b16 %v497, %v492
      %v553 = vpack.c.b16 %v498, %v493
      %v554 = vpack.c.b16 %v504, %v499
      %v555 = vpack.c.b16 %v505, %v500
      %v556 = vpack.c.b16 %v506, %v501
      %v557 = vpack.c.b16 %v507, %v502
      %v558 = vpack.c.b16 %v508, %v503
      %v559 = vpack.c.b16 %v509, %v509
      %v560 = vpack.c.b16 %v510, %v510
      %v561 = vpack.c.b16 %v511, %v511
      %v562 = vpack.c.b16 %v512, %v512
      %v563 = vpack.c.b16 %v513, %v513
      %vm609 = vcmask 154624
      %v611 = vsel %vm609, %v342, 0
      %v614 = vsel %vm609, %v344, 0
      %v617 = vsel %vm609, %v346, 0
      %v620 = vsel %vm609, %v348, 0
      %v623 = vsel %vm609, %v350, 0
      %v626 = vsel %vm609, %v352, 0
      %v629 = vsel %vm609, %v354, 0
      %vm631 = vcmask 1040384
      %vm632 = vcmask 1041408
      %v633 = vsel %vm631, 4294967295, 65535
      %v634 = vsel %vm632, %v633, 0
      %v636 = vand.u32 %v559, %v634
      %v639 = vand.u32 %v560, %v634
      %v642 = vand.u32 %v561, %v634
      %v645 = vand.u32 %v562, %v634
      %v648 = vand.u32 %v563, %v634
      %650 = vmatprep.subr.bf16.mxu0 %v515
      %651 = vmatpush1.bf16.msra.mxu0 %v514
      %652 = vmatprep.subr.bf16.mxu0 %v520
      %653 = vmatpush1.bf16.msra.mxu0 %v519
      %654 = vmatprep.subr.bf16.mxu0 %v525
      %655 = vmatpush1.bf16.msra.mxu0 %v524
      %656 = vmatprep.subr.bf16.mxu0 %v530
      %657 = vmatpush1.bf16.msra.mxu0 %v529
      %658 = vmatprep.subr.bf16.mxu0 %v535
      %659 = vmatpush1.bf16.msra.mxu0 %v534
      %660 = vmatprep.subr.bf16.mxu0 %v540
      %661 = vmatpush1.bf16.msra.mxu0 %v539
      %662 = vmatprep.subr.bf16.mxu0 %v545
      %663 = vmatpush1.bf16.msra.mxu0 %v544
      %664 = vmatprep.subr.bf16.mxu0 %v550
      %665 = vmatpush1.bf16.msra.mxu0 %v549
      %666 = vmatprep.subr.bf16.mxu0 %v555
      %667 = vmatpush1.bf16.msra.mxu0 %v554
      %668 = vmatprep.subr.bf16.mxu0 %v639
      %669 = vmatpush1.bf16.msra.mxu0 %v636
      %670 = vmatprep.subr.bf16.mxu0 0
      %671 = vmatpush1.bf16.msra.mxu0 0
      %672 = vmatprep.subr.bf16.mxu0 0
      %673 = vmatpush1.bf16.msra.mxu0 0
      %674 = vmatprep.subr.bf16.mxu0 0
      %675 = vmatpush1.bf16.msra.mxu0 0
      %676 = vmatprep.subr.bf16.mxu0 0
      %677 = vmatpush1.bf16.msra.mxu0 0
      %678 = vmatprep.subr.bf16.mxu0 0
      %679 = vmatpush1.bf16.msra.mxu0 0
      %680 = vmatprep.subr.bf16.mxu0 0
      %681 = vmatpush1.bf16.msra.mxu0 0
      %682 = vmatprep.mubr.bf16.mxu0 %v611
      %683 = vmatmul.mubr.bf16.gmra.mrb[0].mxu0 %v341
      %v684 = vpop.f32.mrb[0].mxu0
      %v685 = vadd.f32 0.0, %v684
      %v686 = vpop.f32.mrb[0].mxu0
      %v687 = vadd.f32 0.0, %v686
      %v688 = vpop.f32.mrb[0].mxu0
      %v689 = vadd.f32 0.0, %v688
      %v690 = vpop.f32.mrb[0].mxu0
      %v691 = vadd.f32 0.0, %v690
      %692 = vmatprep.mubr.bf16.mxu0 %v614
      %693 = vmatmul.mubr.bf16.gmra.mrb[0].mxu0 %v343
      %v694 = vpop.f32.mrb[0].mxu0
      %v695 = vadd.f32 0.0, %v694
      %v696 = vpop.f32.mrb[0].mxu0
      %v697 = vadd.f32 0.0, %v696
      %v698 = vpop.f32.mrb[0].mxu0
      %v699 = vadd.f32 0.0, %v698
      %v700 = vpop.f32.mrb[0].mxu0
      %v701 = vadd.f32 0.0, %v700
      %702 = vmatprep.mubr.bf16.mxu0 %v617
      %703 = vmatmul.mubr.bf16.gmra.mrb[0].mxu0 %v345
      %v704 = vpop.f32.mrb[0].mxu0
      %v705 = vadd.f32 0.0, %v704
      %v706 = vpop.f32.mrb[0].mxu0
      %v707 = vadd.f32 0.0, %v706
      %v708 = vpop.f32.mrb[0].mxu0
      %v709 = vadd.f32 0.0, %v708
      %v710 = vpop.f32.mrb[0].mxu0
      %v711 = vadd.f32 0.0, %v710
      %712 = vmatprep.mubr.bf16.mxu0 %v620
      %713 = vmatmul.mubr.bf16.gmra.mrb[0].mxu0 %v347
      %v714 = vpop.f32.mrb[0].mxu0
      %v715 = vadd.f32 0.0, %v714
      %v716 = vpop.f32.mrb[0].mxu0
      %v717 = vadd.f32 0.0, %v716
      %v718 = vpop.f32.mrb[0].mxu0
      %v719 = vadd.f32 0.0, %v718
      %v720 = vpop.f32.mrb[0].mxu0
      %v721 = vadd.f32 0.0, %v720
      %722 = vmatprep.mubr.bf16.mxu0 %v623
      %723 = vmatmul.mubr.bf16.gmra.mrb[0].mxu0 %v349
      %v724 = vpop.f32.mrb[0].mxu0
      %v725 = vadd.f32 0.0, %v724
      %v726 = vpop.f32.mrb[0].mxu0
      %v727 = vadd.f32 0.0, %v726
      %v728 = vpop.f32.mrb[0].mxu0
      %v729 = vadd.f32 0.0, %v728
      %v730 = vpop.f32.mrb[0].mxu0
      %v731 = vadd.f32 0.0, %v730
      %732 = vmatprep.mubr.bf16.mxu0 %v626
      %733 = vmatmul.mubr.bf16.gmra.mrb[0].mxu0 %v351
      %v734 = vpop.f32.mrb[0].mxu0
      %v735 = vadd.f32 0.0, %v734
      %v736 = vpop.f32.mrb[0].mxu0
      %v737 = vadd.f32 0.0, %v736
      %v738 = vpop.f32.mrb[0].mxu0
      %v739 = vadd.f32 0.0, %v738
      %v740 = vpop.f32.mrb[0].mxu0
      %v741 = vadd.f32 0.0, %v740
      %742 = vmatprep.mubr.bf16.mxu0 %v629
      %743 = vmatmul.mubr.bf16.gmra.mrb[0].mxu0 %v353
      %v744 = vpop.f32.mrb[0].mxu0
      %v745 = vadd.f32 0.0, %v744
      %v746 = vpop.f32.mrb[0].mxu0
      %v747 = vadd.f32 0.0, %v746
      %v748 = vpop.f32.mrb[0].mxu0
      %v749 = vpop.f32.mrb[0].mxu0
      %750 = vdwg.mxu0
      %751 = vmatprep.subr.bf16.mxu0 %v517
      %752 = vmatpush1.bf16.msra.mxu0 %v516
      %753 = vmatprep.subr.bf16.mxu0 %v522
      %754 = vmatpush1.bf16.msra.mxu0 %v521
      %755 = vmatprep.subr.bf16.mxu0 %v527
      %756 = vmatpush1.bf16.msra.mxu0 %v526
      %757 = vmatprep.subr.bf16.mxu0 %v532
      %758 = vmatpush1.bf16.msra.mxu0 %v531
      %759 = vmatprep.subr.bf16.mxu0 %v537
      %760 = vmatpush1.bf16.msra.mxu0 %v536
      %761 = vmatprep.subr.bf16.mxu0 %v542
      %762 = vmatpush1.bf16.msra.mxu0 %v541
      %763 = vmatprep.subr.bf16.mxu0 %v547
      %764 = vmatpush1.bf16.msra.mxu0 %v546
      %765 = vmatprep.subr.bf16.mxu0 %v552
      %766 = vmatpush1.bf16.msra.mxu0 %v551
      %767 = vmatprep.subr.bf16.mxu0 %v557
      %768 = vmatpush1.bf16.msra.mxu0 %v556
      %769 = vmatprep.subr.bf16.mxu0 %v645
      %770 = vmatpush1.bf16.msra.mxu0 %v642
      %771 = vmatprep.subr.bf16.mxu0 0
      %772 = vmatpush1.bf16.msra.mxu0 0
      %773 = vmatprep.subr.bf16.mxu0 0
      %774 = vmatpush1.bf16.msra.mxu0 0
      %775 = vmatprep.subr.bf16.mxu0 0
      %776 = vmatpush1.bf16.msra.mxu0 0
      %777 = vmatprep.subr.bf16.mxu0 0
      %778 = vmatpush1.bf16.msra.mxu0 0
      %779 = vmatprep.subr.bf16.mxu0 0
      %780 = vmatpush1.bf16.msra.mxu0 0
      %781 = vmatprep.subr.bf16.mxu0 0
      %782 = vmatpush1.bf16.msra.mxu0 0
      %783 = vmatprep.mubr.bf16.mxu0 %v611
      %784 = vmatmul.mubr.bf16.gmra.mrb[0].mxu0 %v341
      %v785 = vpop.f32.mrb[0].mxu0
      %v786 = vadd.f32 0.0, %v785
      %v787 = vpop.f32.mrb[0].mxu0
      %v788 = vadd.f32 0.0, %v787
      %v789 = vpop.f32.mrb[0].mxu0
      %v790 = vadd.f32 0.0, %v789
      %v791 = vpop.f32.mrb[0].mxu0
      %v792 = vadd.f32 0.0, %v791
      %793 = vmatprep.mubr.bf16.mxu0 %v614
      %794 = vmatmul.mubr.bf16.gmra.mrb[0].mxu0 %v343
      %v795 = vpop.f32.mrb[0].mxu0
      %v796 = vadd.f32 0.0, %v795
      %v797 = vpop.f32.mrb[0].mxu0
      %v798 = vadd.f32 0.0, %v797
      %v799 = vpop.f32.mrb[0].mxu0
      %v800 = vadd.f32 0.0, %v799
      %v801 = vpop.f32.mrb[0].mxu0
      %v802 = vadd.f32 0.0, %v801
      %803 = vmatprep.mubr.bf16.mxu0 %v617
      %804 = vmatmul.mubr.bf16.gmra.mrb[0].mxu0 %v345
      %v805 = vpop.f32.mrb[0].mxu0
      %v806 = vadd.f32 0.0, %v805
      %v807 = vpop.f32.mrb[0].mxu0
      %v808 = vadd.f32 0.0, %v807
      %v809 = vpop.f32.mrb[0].mxu0
      %v810 = vadd.f32 0.0, %v809
      %v811 = vpop.f32.mrb[0].mxu0
      %v812 = vadd.f32 0.0, %v811
      %813 = vmatprep.mubr.bf16.mxu0 %v620
      %814 = vmatmul.mubr.bf16.gmra.mrb[0].mxu0 %v347
      %v815 = vpop.f32.mrb[0].mxu0
      %v816 = vadd.f32 0.0, %v815
      %v817 = vpop.f32.mrb[0].mxu0
      %v818 = vadd.f32 0.0, %v817
      %v819 = vpop.f32.mrb[0].mxu0
      %v820 = vadd.f32 0.0, %v819
      %v821 = vpop.f32.mrb[0].mxu0
      %v822 = vadd.f32 0.0, %v821
      %823 = vmatprep.mubr.bf16.mxu0 %v623
      %824 = vmatmul.mubr.bf16.gmra.mrb[0].mxu0 %v349
      %v825 = vpop.f32.mrb[0].mxu0
      %v826 = vadd.f32 0.0, %v825
      %v827 = vpop.f32.mrb[0].mxu0
      %v828 = vadd.f32 0.0, %v827
      %v829 = vpop.f32.mrb[0].mxu0
      %v830 = vadd.f32 0.0, %v829
      %v831 = vpop.f32.mrb[0].mxu0
      %v832 = vadd.f32 0.0, %v831
      %833 = vmatprep.mubr.bf16.mxu0 %v626
      %834 = vmatmul.mubr.bf16.gmra.mrb[0].mxu0 %v351
      %v835 = vpop.f32.mrb[0].mxu0
      %v836 = vadd.f32 0.0, %v835
      %v837 = vpop.f32.mrb[0].mxu0
      %v838 = vadd.f32 0.0, %v837
      %v839 = vpop.f32.mrb[0].mxu0
      %v840 = vadd.f32 0.0, %v839
      %v841 = vpop.f32.mrb[0].mxu0
      %v842 = vadd.f32 0.0, %v841
      %843 = vmatprep.mubr.bf16.mxu0 %v629
      %844 = vmatmul.mubr.bf16.gmra.mrb[0].mxu0 %v353
      %v845 = vpop.f32.mrb[0].mxu0
      %v846 = vadd.f32 0.0, %v845
      %v847 = vpop.f32.mrb[0].mxu0
      %v848 = vadd.f32 0.0, %v847
      %v849 = vpop.f32.mrb[0].mxu0
      %v850 = vpop.f32.mrb[0].mxu0
      %851 = vdwg.mxu0
      %852 = vmatprep.subr.bf16.mxu0 0
      %853 = vmatpush1.bf16.msra.mxu0 %v518
      %854 = vmatprep.subr.bf16.mxu0 0
      %855 = vmatpush1.bf16.msra.mxu0 %v523
      %856 = vmatprep.subr.bf16.mxu0 0
      %857 = vmatpush1.bf16.msra.mxu0 %v528
      %858 = vmatprep.subr.bf16.mxu0 0
      %859 = vmatpush1.bf16.msra.mxu0 %v533
      %860 = vmatprep.subr.bf16.mxu0 0
      %861 = vmatpush1.bf16.msra.mxu0 %v538
      %862 = vmatprep.subr.bf16.mxu0 0
      %863 = vmatpush1.bf16.msra.mxu0 %v543
      %864 = vmatprep.subr.bf16.mxu0 0
      %865 = vmatpush1.bf16.msra.mxu0 %v548
      %866 = vmatprep.subr.bf16.mxu0 0
      %867 = vmatpush1.bf16.msra.mxu0 %v553
      %868 = vmatprep.subr.bf16.mxu0 0
      %869 = vmatpush1.bf16.msra.mxu0 %v558
      %870 = vmatprep.subr.bf16.mxu0 0
      %871 = vmatpush1.bf16.msra.mxu0 %v648
      %872 = vmatprep.subr.bf16.mxu0 0
      %873 = vmatpush1.bf16.msra.mxu0 0
      %874 = vmatprep.subr.bf16.mxu0 0
      %875 = vmatpush1.bf16.msra.mxu0 0
      %876 = vmatprep.subr.bf16.mxu0 0
      %877 = vmatpush1.bf16.msra.mxu0 0
      %878 = vmatprep.subr.bf16.mxu0 0
      %879 = vmatpush1.bf16.msra.mxu0 0
      %880 = vmatprep.subr.bf16.mxu0 0
      %881 = vmatpush1.bf16.msra.mxu0 0
      %882 = vmatprep.subr.bf16.mxu0 0
      %883 = vmatpush1.bf16.msra.mxu0 0
      %884 = vmatprep.mubr.bf16.mxu0 %v611
      %885 = vmatmul.mubr.bf16.gmra.mrb[0].mxu0 %v341
      %v886 = vpop.f32.mrb[0].mxu0
      %v887 = vadd.f32 0.0, %v886
      %v888 = vpop.f32.mrb[0].mxu0
      %v889 = vpop.f32.mrb[0].mxu0
      %v890 = vadd.f32 0.0, %v889
      %v891 = vpop.f32.mrb[0].mxu0
      %892 = vmatprep.mubr.bf16.mxu0 %v614
      %893 = vmatmul.mubr.bf16.gmra.mrb[0].mxu0 %v343
      %v894 = vpop.f32.mrb[0].mxu0
      %v895 = vadd.f32 0.0, %v894
      %v896 = vpop.f32.mrb[0].mxu0
      %v897 = vpop.f32.mrb[0].mxu0
      %v898 = vadd.f32 0.0, %v897
      %v899 = vpop.f32.mrb[0].mxu0
      %900 = vmatprep.mubr.bf16.mxu0 %v617
      %901 = vmatmul.mubr.bf16.gmra.mrb[0].mxu0 %v345
      %v902 = vpop.f32.mrb[0].mxu0
      %v903 = vadd.f32 0.0, %v902
      %v904 = vpop.f32.mrb[0].mxu0
      %v905 = vpop.f32.mrb[0].mxu0
      %v906 = vadd.f32 0.0, %v905
      %v907 = vpop.f32.mrb[0].mxu0
      %908 = vmatprep.mubr.bf16.mxu0 %v620
      %909 = vmatmul.mubr.bf16.gmra.mrb[0].mxu0 %v347
      %v910 = vpop.f32.mrb[0].mxu0
      %v911 = vadd.f32 0.0, %v910
      %v912 = vpop.f32.mrb[0].mxu0
      %v913 = vpop.f32.mrb[0].mxu0
      %v914 = vadd.f32 0.0, %v913
      %v915 = vpop.f32.mrb[0].mxu0
      %916 = vmatprep.mubr.bf16.mxu0 %v623
      %917 = vmatmul.mubr.bf16.gmra.mrb[0].mxu0 %v349
      %v918 = vpop.f32.mrb[0].mxu0
      %v919 = vadd.f32 0.0, %v918
      %v920 = vpop.f32.mrb[0].mxu0
      %v921 = vpop.f32.mrb[0].mxu0
      %v922 = vadd.f32 0.0, %v921
      %v923 = vpop.f32.mrb[0].mxu0
      %924 = vmatprep.mubr.bf16.mxu0 %v626
      %925 = vmatmul.mubr.bf16.gmra.mrb[0].mxu0 %v351
      %v926 = vpop.f32.mrb[0].mxu0
      %v927 = vadd.f32 0.0, %v926
      %v928 = vpop.f32.mrb[0].mxu0
      %v929 = vpop.f32.mrb[0].mxu0
      %v930 = vadd.f32 0.0, %v929
      %v931 = vpop.f32.mrb[0].mxu0
      %932 = vmatprep.mubr.bf16.mxu0 %v629
      %933 = vmatmul.mubr.bf16.gmra.mrb[0].mxu0 %v353
      %v934 = vpop.f32.mrb[0].mxu0
      %v935 = vadd.f32 0.0, %v934
      %v936 = vpop.f32.mrb[0].mxu0
      %v937 = vpop.f32.mrb[0].mxu0
      %v938 = vpop.f32.mrb[0].mxu0
      %939 = vdwg.mxu0
      %966 = vrot.lane.b32.xlu0 %v687, 112
      %v967 = vpop.permute.xlu0 %966
      %968 = vrot.lane.b32.xlu0 %v786, 112
      %v969 = vpop.permute.xlu0 %968
      %970 = vrot.lane.b32.xlu0 %v691, 112
      %v971 = vpop.permute.xlu0 %970
      %972 = vrot.lane.b32.xlu0 %v790, 112
      %v973 = vpop.permute.xlu0 %972
      %974 = vrot.lane.b32.xlu0 %v697, 112
      %v975 = vpop.permute.xlu0 %974
      %976 = vrot.lane.b32.xlu0 %v796, 112
      %v977 = vpop.permute.xlu0 %976
      %978 = vrot.lane.b32.xlu0 %v701, 112
      %v979 = vpop.permute.xlu0 %978
      %980 = vrot.lane.b32.xlu0 %v800, 112
      %v981 = vpop.permute.xlu0 %980
      %982 = vrot.lane.b32.xlu0 %v707, 112
      %v983 = vpop.permute.xlu0 %982
      %984 = vrot.lane.b32.xlu0 %v806, 112
      %v985 = vpop.permute.xlu0 %984
      %986 = vrot.lane.b32.xlu0 %v711, 112
      %v987 = vpop.permute.xlu0 %986
      %988 = vrot.lane.b32.xlu0 %v810, 112
      %v989 = vpop.permute.xlu0 %988
      %990 = vrot.lane.b32.xlu0 %v717, 112
      %v991 = vpop.permute.xlu0 %990
      %992 = vrot.lane.b32.xlu0 %v816, 112
      %v993 = vpop.permute.xlu0 %992
      %994 = vrot.lane.b32.xlu0 %v721, 112
      %v995 = vpop.permute.xlu0 %994
      %996 = vrot.lane.b32.xlu0 %v820, 112
      %v997 = vpop.permute.xlu0 %996
      %998 = vrot.lane.b32.xlu0 %v727, 112
      %v999 = vpop.permute.xlu0 %998
      %1000 = vrot.lane.b32.xlu0 %v826, 112
      %v1001 = vpop.permute.xlu0 %1000
      %1002 = vrot.lane.b32.xlu0 %v731, 112
      %v1003 = vpop.permute.xlu0 %1002
      %1004 = vrot.lane.b32.xlu0 %v830, 112
      %v1005 = vpop.permute.xlu0 %1004
      %1006 = vrot.lane.b32.xlu0 %v737, 112
      %v1007 = vpop.permute.xlu0 %1006
      %1008 = vrot.lane.b32.xlu0 %v836, 112
      %v1009 = vpop.permute.xlu0 %1008
      %1010 = vrot.lane.b32.xlu0 %v741, 112
      %v1011 = vpop.permute.xlu0 %1010
      %1012 = vrot.lane.b32.xlu0 %v840, 112
      %v1013 = vpop.permute.xlu0 %1012
      %1014 = vrot.lane.b32.xlu0 %v747, 112
      %v1015 = vpop.permute.xlu0 %1014
      %1016 = vrot.lane.b32.xlu0 %v846, 112
      %v1017 = vpop.permute.xlu0 %1016
      %vm1018 = vcmask 916480
      %v1019 = vsel %vm1018, %v967, %v969
      %v1020 = vsel %vm1018, %v971, %v973
      %v1021 = vsel %vm1018, %v975, %v977
      %v1022 = vsel %vm1018, %v979, %v981
      %v1023 = vsel %vm1018, %v983, %v985
      %v1024 = vsel %vm1018, %v987, %v989
      %v1025 = vsel %vm1018, %v991, %v993
      %v1026 = vsel %vm1018, %v995, %v997
      %v1027 = vsel %vm1018, %v999, %v1001
      %v1028 = vsel %vm1018, %v1003, %v1005
      %v1029 = vsel %vm1018, %v1007, %v1009
      %v1030 = vsel %vm1018, %v1011, %v1013
      %v1031 = vsel %vm1018, %v1015, %v1017
      %v1058 = vmax.f32 %v685, %v1019
      %v1059 = vmax.f32 %v687, %v969
      %v1060 = vmax.f32 %v689, %v1020
      %v1061 = vmax.f32 %v691, %v973
      %v1062 = vmax.f32 %v695, %v1021
      %v1063 = vmax.f32 %v697, %v977
      %v1064 = vmax.f32 %v699, %v1022
      %v1065 = vmax.f32 %v701, %v981
      %v1066 = vmax.f32 %v705, %v1023
      %v1067 = vmax.f32 %v707, %v985
      %v1068 = vmax.f32 %v709, %v1024
      %v1069 = vmax.f32 %v711, %v989
      %v1070 = vmax.f32 %v715, %v1025
      %v1071 = vmax.f32 %v717, %v993
      %v1072 = vmax.f32 %v719, %v1026
      %v1073 = vmax.f32 %v721, %v997
      %v1074 = vmax.f32 %v725, %v1027
      %v1075 = vmax.f32 %v727, %v1001
      %v1076 = vmax.f32 %v729, %v1028
      %v1077 = vmax.f32 %v731, %v1005
      %v1078 = vmax.f32 %v735, %v1029
      %v1079 = vmax.f32 %v737, %v1009
      %v1080 = vmax.f32 %v739, %v1030
      %v1081 = vmax.f32 %v741, %v1013
      %v1082 = vmax.f32 %v745, %v1031
      %v1083 = vmax.f32 %v747, %v1017
      %1110 = vrot.lane.b32.xlu0 %v788, 112
      %v1111 = vpop.permute.xlu0 %1110
      %1112 = vrot.lane.b32.xlu0 %v887, 112
      %v1113 = vpop.permute.xlu0 %1112
      %1114 = vrot.lane.b32.xlu0 %v792, 112
      %v1115 = vpop.permute.xlu0 %1114
      %1116 = vrot.lane.b32.xlu0 %v890, 112
      %v1117 = vpop.permute.xlu0 %1116
      %1118 = vrot.lane.b32.xlu0 %v798, 112
      %v1119 = vpop.permute.xlu0 %1118
      %1120 = vrot.lane.b32.xlu0 %v895, 112
      %v1121 = vpop.permute.xlu0 %1120
      %1122 = vrot.lane.b32.xlu0 %v802, 112
      %v1123 = vpop.permute.xlu0 %1122
      %1124 = vrot.lane.b32.xlu0 %v898, 112
      %v1125 = vpop.permute.xlu0 %1124
      %1126 = vrot.lane.b32.xlu0 %v808, 112
      %v1127 = vpop.permute.xlu0 %1126
      %1128 = vrot.lane.b32.xlu0 %v903, 112
      %v1129 = vpop.permute.xlu0 %1128
      %1130 = vrot.lane.b32.xlu0 %v812, 112
      %v1131 = vpop.permute.xlu0 %1130
      %1132 = vrot.lane.b32.xlu0 %v906, 112
      %v1133 = vpop.permute.xlu0 %1132
      %1134 = vrot.lane.b32.xlu0 %v818, 112
      %v1135 = vpop.permute.xlu0 %1134
      %1136 = vrot.lane.b32.xlu0 %v911, 112
      %v1137 = vpop.permute.xlu0 %1136
      %1138 = vrot.lane.b32.xlu0 %v822, 112
      %v1139 = vpop.permute.xlu0 %1138
      %1140 = vrot.lane.b32.xlu0 %v914, 112
      %v1141 = vpop.permute.xlu0 %1140
      %1142 = vrot.lane.b32.xlu0 %v828, 112
      %v1143 = vpop.permute.xlu0 %1142
      %1144 = vrot.lane.b32.xlu0 %v919, 112
      %v1145 = vpop.permute.xlu0 %1144
      %1146 = vrot.lane.b32.xlu0 %v832, 112
      %v1147 = vpop.permute.xlu0 %1146
      %1148 = vrot.lane.b32.xlu0 %v922, 112
      %v1149 = vpop.permute.xlu0 %1148
      %1150 = vrot.lane.b32.xlu0 %v838, 112
      %v1151 = vpop.permute.xlu0 %1150
      %1152 = vrot.lane.b32.xlu0 %v927, 112
      %v1153 = vpop.permute.xlu0 %1152
      %1154 = vrot.lane.b32.xlu0 %v842, 112
      %v1155 = vpop.permute.xlu0 %1154
      %1156 = vrot.lane.b32.xlu0 %v930, 112
      %v1157 = vpop.permute.xlu0 %1156
      %1158 = vrot.lane.b32.xlu0 %v848, 112
      %v1159 = vpop.permute.xlu0 %1158
      %1160 = vrot.lane.b32.xlu0 %v935, 112
      %v1161 = vpop.permute.xlu0 %1160
      %v1162 = vsel %vm1018, %v1111, %v1113
      %v1163 = vsel %vm1018, %v1115, %v1117
      %v1164 = vsel %vm1018, %v1119, %v1121
      %v1165 = vsel %vm1018, %v1123, %v1125
      %v1166 = vsel %vm1018, %v1127, %v1129
      %v1167 = vsel %vm1018, %v1131, %v1133
      %v1168 = vsel %vm1018, %v1135, %v1137
      %v1169 = vsel %vm1018, %v1139, %v1141
      %v1170 = vsel %vm1018, %v1143, %v1145
      %v1171 = vsel %vm1018, %v1147, %v1149
      %v1172 = vsel %vm1018, %v1151, %v1153
      %v1173 = vsel %vm1018, %v1155, %v1157
      %v1174 = vsel %vm1018, %v1159, %v1161
      %v1201 = vmax.f32 %v786, %v1162
      %v1202 = vmax.f32 %v788, %v1113
      %v1203 = vmax.f32 %v790, %v1163
      %v1204 = vmax.f32 %v792, %v1117
      %v1205 = vmax.f32 %v796, %v1164
      %v1206 = vmax.f32 %v798, %v1121
      %v1207 = vmax.f32 %v800, %v1165
      %v1208 = vmax.f32 %v802, %v1125
      %v1209 = vmax.f32 %v806, %v1166
      %v1210 = vmax.f32 %v808, %v1129
      %v1211 = vmax.f32 %v810, %v1167
      %v1212 = vmax.f32 %v812, %v1133
      %v1213 = vmax.f32 %v816, %v1168
      %v1214 = vmax.f32 %v818, %v1137
      %v1215 = vmax.f32 %v820, %v1169
      %v1216 = vmax.f32 %v822, %v1141
      %v1217 = vmax.f32 %v826, %v1170
      %v1218 = vmax.f32 %v828, %v1145
      %v1219 = vmax.f32 %v830, %v1171
      %v1220 = vmax.f32 %v832, %v1149
      %v1221 = vmax.f32 %v836, %v1172
      %v1222 = vmax.f32 %v838, %v1153
      %v1223 = vmax.f32 %v840, %v1173
      %v1224 = vmax.f32 %v842, %v1157
      %v1225 = vmax.f32 %v846, %v1174
      %v1226 = vmax.f32 %v848, %v1161
      %1253 = vrot.lane.b32.xlu0 %v1201, 96
      %v1254 = vpop.permute.xlu0 %1253
      %1255 = vrot.lane.b32.xlu0 %v1202, 96
      %v1256 = vpop.permute.xlu0 %1255
      %1257 = vrot.lane.b32.xlu0 %v1203, 96
      %v1258 = vpop.permute.xlu0 %1257
      %1259 = vrot.lane.b32.xlu0 %v1204, 96
      %v1260 = vpop.permute.xlu0 %1259
      %1261 = vrot.lane.b32.xlu0 %v1205, 96
      %v1262 = vpop.permute.xlu0 %1261
      %1263 = vrot.lane.b32.xlu0 %v1206, 96
      %v1264 = vpop.permute.xlu0 %1263
      %1265 = vrot.lane.b32.xlu0 %v1207, 96
      %v1266 = vpop.permute.xlu0 %1265
      %1267 = vrot.lane.b32.xlu0 %v1208, 96
      %v1268 = vpop.permute.xlu0 %1267
      %1269 = vrot.lane.b32.xlu0 %v1209, 96
      %v1270 = vpop.permute.xlu0 %1269
      %1271 = vrot.lane.b32.xlu0 %v1210, 96
      %v1272 = vpop.permute.xlu0 %1271
      %1273 = vrot.lane.b32.xlu0 %v1211, 96
      %v1274 = vpop.permute.xlu0 %1273
      %1275 = vrot.lane.b32.xlu0 %v1212, 96
      %v1276 = vpop.permute.xlu0 %1275
      %1277 = vrot.lane.b32.xlu0 %v1213, 96
      %v1278 = vpop.permute.xlu0 %1277
      %1279 = vrot.lane.b32.xlu0 %v1214, 96
      %v1280 = vpop.permute.xlu0 %1279
      %1281 = vrot.lane.b32.xlu0 %v1215, 96
      %v1282 = vpop.permute.xlu0 %1281
      %1283 = vrot.lane.b32.xlu0 %v1216, 96
      %v1284 = vpop.permute.xlu0 %1283
      %1285 = vrot.lane.b32.xlu0 %v1217, 96
      %v1286 = vpop.permute.xlu0 %1285
      %1287 = vrot.lane.b32.xlu0 %v1218, 96
      %v1288 = vpop.permute.xlu0 %1287
      %1289 = vrot.lane.b32.xlu0 %v1219, 96
      %v1290 = vpop.permute.xlu0 %1289
      %1291 = vrot.lane.b32.xlu0 %v1220, 96
      %v1292 = vpop.permute.xlu0 %1291
      %1293 = vrot.lane.b32.xlu0 %v1221, 96
      %v1294 = vpop.permute.xlu0 %1293
      %1295 = vrot.lane.b32.xlu0 %v1222, 96
      %v1296 = vpop.permute.xlu0 %1295
      %1297 = vrot.lane.b32.xlu0 %v1223, 96
      %v1298 = vpop.permute.xlu0 %1297
      %1299 = vrot.lane.b32.xlu0 %v1224, 96
      %v1300 = vpop.permute.xlu0 %1299
      %1301 = vrot.lane.b32.xlu0 %v1225, 96
      %v1302 = vpop.permute.xlu0 %1301
      %1303 = vrot.lane.b32.xlu0 %v1226, 96
      %v1304 = vpop.permute.xlu0 %1303
      %vm1305 = vcmask 785408
      %v1306 = vsel %vm1305, %v1254, %v1256
      %v1307 = vsel %vm1305, %v1258, %v1260
      %v1308 = vsel %vm1305, %v1262, %v1264
      %v1309 = vsel %vm1305, %v1266, %v1268
      %v1310 = vsel %vm1305, %v1270, %v1272
      %v1311 = vsel %vm1305, %v1274, %v1276
      %v1312 = vsel %vm1305, %v1278, %v1280
      %v1313 = vsel %vm1305, %v1282, %v1284
      %v1314 = vsel %vm1305, %v1286, %v1288
      %v1315 = vsel %vm1305, %v1290, %v1292
      %v1316 = vsel %vm1305, %v1294, %v1296
      %v1317 = vsel %vm1305, %v1298, %v1300
      %v1318 = vsel %vm1305, %v1302, %v1304
      %v1345 = vmax.f32 %v1058, %v1306
      %v1346 = vmax.f32 %v1059, %v1256
      %v1347 = vmax.f32 %v1060, %v1307
      %v1348 = vmax.f32 %v1061, %v1260
      %v1349 = vmax.f32 %v1062, %v1308
      %v1350 = vmax.f32 %v1063, %v1264
      %v1351 = vmax.f32 %v1064, %v1309
      %v1352 = vmax.f32 %v1065, %v1268
      %v1353 = vmax.f32 %v1066, %v1310
      %v1354 = vmax.f32 %v1067, %v1272
      %v1355 = vmax.f32 %v1068, %v1311
      %v1356 = vmax.f32 %v1069, %v1276
      %v1357 = vmax.f32 %v1070, %v1312
      %v1358 = vmax.f32 %v1071, %v1280
      %v1359 = vmax.f32 %v1072, %v1313
      %v1360 = vmax.f32 %v1073, %v1284
      %v1361 = vmax.f32 %v1074, %v1314
      %v1362 = vmax.f32 %v1075, %v1288
      %v1363 = vmax.f32 %v1076, %v1315
      %v1364 = vmax.f32 %v1077, %v1292
      %v1365 = vmax.f32 %v1078, %v1316
      %v1366 = vmax.f32 %v1079, %v1296
      %v1367 = vmax.f32 %v1080, %v1317
      %v1368 = vmax.f32 %v1081, %v1300
      %v1369 = vmax.f32 %v1082, %v1318
      %v1370 = vmax.f32 %v1083, %v1304
      %v1371 = vld [vmem:[%s4] ss:$8 sm:$0x3]
      %v1373 = vlaneseq
      %v1374 = vshrl.u32 %v1373, 7
      %v1375 = vsub.s32 0, %v1374
      %v1376 = vrot.slane %v1371, %v1375
      %v1377 = vlaneseq
      %v1378 = vshrl.u32 %v1377, 7
      %v1379 = vsub.s32 1, %v1378
      %v1380 = vrot.slane %v1371, %v1379
      %v1383 = vadd.f32 %v1345, %v1376
      %v1384 = vadd.f32 %v1346, %v1380
      %v1385 = vadd.f32 %v1347, %v1376
      %v1386 = vadd.f32 %v1348, %v1380
      %v1387 = vadd.f32 %v1349, %v1376
      %v1388 = vadd.f32 %v1350, %v1380
      %v1389 = vadd.f32 %v1351, %v1376
      %v1390 = vadd.f32 %v1352, %v1380
      %v1391 = vadd.f32 %v1353, %v1376
      %v1392 = vadd.f32 %v1354, %v1380
      %v1393 = vadd.f32 %v1355, %v1376
      %v1394 = vadd.f32 %v1356, %v1380
      %v1395 = vadd.f32 %v1357, %v1376
      %v1396 = vadd.f32 %v1358, %v1380
      %v1397 = vadd.f32 %v1359, %v1376
      %v1398 = vadd.f32 %v1360, %v1380
      %v1399 = vadd.f32 %v1361, %v1376
      %v1400 = vadd.f32 %v1362, %v1380
      %v1401 = vadd.f32 %v1363, %v1376
      %v1402 = vadd.f32 %v1364, %v1380
      %v1403 = vadd.f32 %v1365, %v1376
      %v1404 = vadd.f32 %v1366, %v1380
      %v1405 = vadd.f32 %v1367, %v1376
      %v1406 = vadd.f32 %v1368, %v1380
      %v1407 = vadd.f32 %v1369, %v1376
      %v1408 = vadd.f32 %v1370, %v1380
      %v1409 = vmax.f32 %v1383, 0.0
      %v1410 = vmax.f32 %v1384, 0.0
      %v1411 = vmax.f32 %v1385, 0.0
      %v1412 = vmax.f32 %v1386, 0.0
      %v1413 = vmax.f32 %v1387, 0.0
      %v1414 = vmax.f32 %v1388, 0.0
      %v1415 = vmax.f32 %v1389, 0.0
      %v1416 = vmax.f32 %v1390, 0.0
      %v1417 = vmax.f32 %v1391, 0.0
      %v1418 = vmax.f32 %v1392, 0.0
      %v1419 = vmax.f32 %v1393, 0.0
      %v1420 = vmax.f32 %v1394, 0.0
      %v1421 = vmax.f32 %v1395, 0.0
      %v1422 = vmax.f32 %v1396, 0.0
      %v1423 = vmax.f32 %v1397, 0.0
      %v1424 = vmax.f32 %v1398, 0.0
      %v1425 = vmax.f32 %v1399, 0.0
      %v1426 = vmax.f32 %v1400, 0.0
      %v1427 = vmax.f32 %v1401, 0.0
      %v1428 = vmax.f32 %v1402, 0.0
      %v1429 = vmax.f32 %v1403, 0.0
      %v1430 = vmax.f32 %v1404, 0.0
      %v1431 = vmax.f32 %v1405, 0.0
      %v1432 = vmax.f32 %v1406, 0.0
      %v1433 = vmax.f32 %v1407, 0.0
      %v1434 = vmax.f32 %v1408, 0.0
      %v1435 = vpack.c.bf16 %v1411, %v1409
      %v1436 = vpack.c.bf16 %v1412, %v1410
      %v1437 = vpack.c.bf16 %v1415, %v1413
      %v1438 = vpack.c.bf16 %v1416, %v1414
      %v1439 = vpack.c.bf16 %v1419, %v1417
      %v1440 = vpack.c.bf16 %v1420, %v1418
      %v1441 = vpack.c.bf16 %v1423, %v1421
      %v1442 = vpack.c.bf16 %v1424, %v1422
      %v1443 = vpack.c.bf16 %v1427, %v1425
      %v1444 = vpack.c.bf16 %v1428, %v1426
      %v1445 = vpack.c.bf16 %v1431, %v1429
      %v1446 = vpack.c.bf16 %v1432, %v1430
      %v1447 = vpack.c.bf16 %v1433, %v1433
      %v1448 = vpack.c.bf16 %v1434, %v1434
      %v1449 = vld [vmem:[%s2] sm:$0xf]
      %v1450 = vld [vmem:[%s2 + $0x4] sm:$0xf]
      %v1451 = vld [vmem:[%s2 + $0x8] sm:$0xf]
      %v1452 = vld [vmem:[%s2 + $0xc] sm:$0xf]
      %v1453 = vld [vmem:[%s2 + $0x10] sm:$0xf]
      %v1454 = vld [vmem:[%s2 + $0x14] sm:$0xf]
      %v1455 = vld [vmem:[%s2 + $0x18] sm:$0xf]
      %v1456 = vld [vmem:[%s2 + $0x1c] sm:$0xf]
      %v1457 = vld [vmem:[%s2 + $0x20] sm:$0xf]
      %v1458 = vld [vmem:[%s2 + $0x24] sm:$0xf]
      %v1459 = vld [vmem:[%s2 + $0x28] sm:$0xf]
      %v1460 = vld [vmem:[%s2 + $0x2c] sm:$0xf]
      %v1461 = vld [vmem:[%s2 + $0x30] sm:$0xf]
      %v1462 = vld [vmem:[%s2 + $0x34] sm:$0xf]
      %v1463 = vld [vmem:[%s2 + $0x38] sm:$0xf]
      %v1464 = vld [vmem:[%s2 + $0x3c] sm:$0xf]
      %v1465 = vld [vmem:[%s2 + $0x40] sm:$0xf]
      %v1466 = vld [vmem:[%s2 + $0x44] sm:$0xf]
      %v1467 = vld [vmem:[%s4 + $0x1] ss:$0 sm:$0xff]
      %v1486 = vunpack.c.l.b16 %v1449
      %v1487 = vunpack.c.l.b16 %v1450
      %v1488 = vunpack.c.l.b16 %v1451
      %v1489 = vunpack.c.l.b16 %v1452
      %v1490 = vunpack.c.l.b16 %v1453
      %v1491 = vunpack.c.l.b16 %v1454
      %v1492 = vunpack.c.l.b16 %v1455
      %v1493 = vunpack.c.l.b16 %v1456
      %v1494 = vunpack.c.l.b16 %v1457
      %v1495 = vunpack.c.l.b16 %v1458
      %v1496 = vunpack.c.l.b16 %v1459
      %v1497 = vunpack.c.l.b16 %v1460
      %v1498 = vunpack.c.l.b16 %v1461
      %v1499 = vunpack.c.l.b16 %v1462
      %v1500 = vunpack.c.l.b16 %v1463
      %v1501 = vunpack.c.l.b16 %v1464
      %v1502 = vunpack.c.l.b16 %v1465
      %v1503 = vunpack.c.l.b16 %v1466
      %v1504 = vpack.c.b16 %v1487, %v1486
      %v1505 = vpack.c.b16 %v1489, %v1488
      %v1506 = vpack.c.b16 %v1491, %v1490
      %v1507 = vpack.c.b16 %v1493, %v1492
      %v1508 = vpack.c.b16 %v1495, %v1494
      %v1509 = vpack.c.b16 %v1497, %v1496
      %v1510 = vpack.c.b16 %v1499, %v1498
      %v1511 = vpack.c.b16 %v1501, %v1500
      %v1512 = vpack.c.b16 %v1503, %v1502
      %vm1522 = vcmask 130048
      %v1524 = vsel %vm1522, %v1436, 0
      %v1527 = vsel %vm1522, %v1438, 0
      %v1530 = vsel %vm1522, %v1440, 0
      %v1533 = vsel %vm1522, %v1442, 0
      %v1536 = vsel %vm1522, %v1444, 0
      %v1539 = vsel %vm1522, %v1446, 0
      %v1542 = vsel %vm1522, %v1448, 0
      %1544 = vmatprep.subr.bf16.mxu0 0
      %1545 = vmatpush1.bf16.msra.mxu0 %v1504
      %1546 = vmatprep.subr.bf16.mxu0 0
      %1547 = vmatpush1.bf16.msra.mxu0 %v1505
      %1548 = vmatprep.subr.bf16.mxu0 0
      %1549 = vmatpush1.bf16.msra.mxu0 %v1506
      %1550 = vmatprep.subr.bf16.mxu0 0
      %1551 = vmatpush1.bf16.msra.mxu0 %v1507
      %1552 = vmatprep.subr.bf16.mxu0 0
      %1553 = vmatpush1.bf16.msra.mxu0 %v1508
      %1554 = vmatprep.subr.bf16.mxu0 0
      %1555 = vmatpush1.bf16.msra.mxu0 %v1509
      %1556 = vmatprep.subr.bf16.mxu0 0
      %1557 = vmatpush1.bf16.msra.mxu0 %v1510
      %1558 = vmatprep.subr.bf16.mxu0 0
      %1559 = vmatpush1.bf16.msra.mxu0 %v1511
      %1560 = vmatprep.subr.bf16.mxu0 0
      %1561 = vmatpush1.bf16.msra.mxu0 %v1512
      %1562 = vmatprep.subr.bf16.mxu0 0
      %1563 = vmatpush1.bf16.msra.mxu0 0
      %1564 = vmatprep.subr.bf16.mxu0 0
      %1565 = vmatpush1.bf16.msra.mxu0 0
      %1566 = vmatprep.subr.bf16.mxu0 0
      %1567 = vmatpush1.bf16.msra.mxu0 0
      %1568 = vmatprep.subr.bf16.mxu0 0
      %1569 = vmatpush1.bf16.msra.mxu0 0
      %1570 = vmatprep.subr.bf16.mxu0 0
      %1571 = vmatpush1.bf16.msra.mxu0 0
      %1572 = vmatprep.subr.bf16.mxu0 0
      %1573 = vmatpush1.bf16.msra.mxu0 0
      %1574 = vmatprep.subr.bf16.mxu0 0
      %1575 = vmatpush1.bf16.msra.mxu0 0
      %1576 = vmatprep.mubr.bf16.mxu0 %v1524
      %1577 = vmatmul.mubr.bf16.gmra.mrb[0].mxu0 %v1435
      %v1578 = vpop.f32.mrb[0].mxu0
      %v1579 = vadd.f32 %v1467, %v1578
      %v1580 = vpop.f32.mrb[0].mxu0
      %v1581 = vpop.f32.mrb[0].mxu0
      %v1582 = vadd.f32 %v1467, %v1581
      %v1583 = vpop.f32.mrb[0].mxu0
      %1584 = vmatprep.mubr.bf16.mxu0 %v1527
      %1585 = vmatmul.mubr.bf16.gmra.mrb[0].mxu0 %v1437
      %v1586 = vpop.f32.mrb[0].mxu0
      %v1587 = vadd.f32 %v1467, %v1586
      %v1588 = vpop.f32.mrb[0].mxu0
      %v1589 = vpop.f32.mrb[0].mxu0
      %v1590 = vadd.f32 %v1467, %v1589
      %v1591 = vpop.f32.mrb[0].mxu0
      %1592 = vmatprep.mubr.bf16.mxu0 %v1530
      %1593 = vmatmul.mubr.bf16.gmra.mrb[0].mxu0 %v1439
      %v1594 = vpop.f32.mrb[0].mxu0
      %v1595 = vadd.f32 %v1467, %v1594
      %v1596 = vpop.f32.mrb[0].mxu0
      %v1597 = vpop.f32.mrb[0].mxu0
      %v1598 = vadd.f32 %v1467, %v1597
      %v1599 = vpop.f32.mrb[0].mxu0
      %1600 = vmatprep.mubr.bf16.mxu0 %v1533
      %1601 = vmatmul.mubr.bf16.gmra.mrb[0].mxu0 %v1441
      %v1602 = vpop.f32.mrb[0].mxu0
      %v1603 = vadd.f32 %v1467, %v1602
      %v1604 = vpop.f32.mrb[0].mxu0
      %v1605 = vpop.f32.mrb[0].mxu0
      %v1606 = vadd.f32 %v1467, %v1605
      %v1607 = vpop.f32.mrb[0].mxu0
      %1608 = vmatprep.mubr.bf16.mxu0 %v1536
      %1609 = vmatmul.mubr.bf16.gmra.mrb[0].mxu0 %v1443
      %v1610 = vpop.f32.mrb[0].mxu0
      %v1611 = vadd.f32 %v1467, %v1610
      %v1612 = vpop.f32.mrb[0].mxu0
      %v1613 = vpop.f32.mrb[0].mxu0
      %v1614 = vadd.f32 %v1467, %v1613
      %v1615 = vpop.f32.mrb[0].mxu0
      %1616 = vmatprep.mubr.bf16.mxu0 %v1539
      %1617 = vmatmul.mubr.bf16.gmra.mrb[0].mxu0 %v1445
      %v1618 = vpop.f32.mrb[0].mxu0
      %v1619 = vadd.f32 %v1467, %v1618
      %v1620 = vpop.f32.mrb[0].mxu0
      %v1621 = vpop.f32.mrb[0].mxu0
      %v1622 = vadd.f32 %v1467, %v1621
      %v1623 = vpop.f32.mrb[0].mxu0
      %1624 = vmatprep.mubr.bf16.mxu0 %v1542
      %1625 = vmatmul.mubr.bf16.gmra.mrb[0].mxu0 %v1447
      %v1626 = vpop.f32.mrb[0].mxu0
      %v1627 = vadd.f32 %v1467, %v1626
      %v1628 = vpop.f32.mrb[0].mxu0
      %v1629 = vpop.f32.mrb[0].mxu0
      %v1630 = vpop.f32.mrb[0].mxu0
      %1631 = vdwg.mxu0
      %v1632 = vmax.f32 %v1579, 0.0
      %v1633 = vmax.f32 %v1582, 0.0
      %v1634 = vmax.f32 %v1587, 0.0
      %v1635 = vmax.f32 %v1590, 0.0
      %v1636 = vmax.f32 %v1595, 0.0
      %v1637 = vmax.f32 %v1598, 0.0
      %v1638 = vmax.f32 %v1603, 0.0
      %v1639 = vmax.f32 %v1606, 0.0
      %v1640 = vmax.f32 %v1611, 0.0
      %v1641 = vmax.f32 %v1614, 0.0
      %v1642 = vmax.f32 %v1619, 0.0
      %v1643 = vmax.f32 %v1622, 0.0
      %v1644 = vmax.f32 %v1627, 0.0
      %v1645 = vpack.c.bf16 %v1633, %v1632
      %v1646 = vpack.c.bf16 %v1635, %v1634
      %v1647 = vpack.c.bf16 %v1637, %v1636
      %v1648 = vpack.c.bf16 %v1639, %v1638
      %v1649 = vpack.c.bf16 %v1641, %v1640
      %v1650 = vpack.c.bf16 %v1643, %v1642
      %v1651 = vpack.c.bf16 %v1644, %v1644
      %v1652 = vld [vmem:[%s3] sm:$0xf]
      %v1653 = vld [vmem:[%s3 + $0x4] sm:$0xf]
      %v1654 = vld [vmem:[%s3 + $0x8] sm:$0xf]
      %v1655 = vld [vmem:[%s3 + $0xc] sm:$0xf]
      %v1656 = vld [vmem:[%s3 + $0x10] sm:$0xf]
      %v1657 = vld [vmem:[%s3 + $0x14] sm:$0xf]
      %v1658 = vld [vmem:[%s3 + $0x18] sm:$0xf]
      %v1659 = vld [vmem:[%s3 + $0x1c] sm:$0xf]
      %v1660 = vld [vmem:[%s3 + $0x20] sm:$0xf]
      %v1661 = vld [vmem:[%s3 + $0x24] sm:$0xf]
      %v1662 = vld [vmem:[%s3 + $0x28] sm:$0xf]
      %v1663 = vld [vmem:[%s3 + $0x2c] sm:$0xf]
      %v1664 = vld [vmem:[%s3 + $0x30] sm:$0xf]
      %v1665 = vld [vmem:[%s3 + $0x34] sm:$0xf]
      %v1666 = vld [vmem:[%s3 + $0x38] sm:$0xf]
      %v1667 = vld [vmem:[%s3 + $0x3c] sm:$0xf]
      %v1668 = vld [vmem:[%s4 + $0x2] ss:$0 sm:$0xff]
      %v1685 = vunpack.c.l.b16 %v1652
      %v1686 = vunpack.c.l.b16 %v1653
      %v1687 = vunpack.c.l.b16 %v1654
      %v1688 = vunpack.c.l.b16 %v1655
      %v1689 = vunpack.c.l.b16 %v1656
      %v1690 = vunpack.c.l.b16 %v1657
      %v1691 = vunpack.c.l.b16 %v1658
      %v1692 = vunpack.c.l.b16 %v1659
      %v1693 = vunpack.c.l.b16 %v1660
      %v1694 = vunpack.c.l.b16 %v1661
      %v1695 = vunpack.c.l.b16 %v1662
      %v1696 = vunpack.c.l.b16 %v1663
      %v1697 = vunpack.c.l.b16 %v1664
      %v1698 = vunpack.c.l.b16 %v1665
      %v1699 = vunpack.c.l.b16 %v1666
      %v1700 = vunpack.c.l.b16 %v1667
      %v1701 = vpack.c.b16 %v1686, %v1685
      %v1702 = vpack.c.b16 %v1688, %v1687
      %v1703 = vpack.c.b16 %v1690, %v1689
      %v1704 = vpack.c.b16 %v1692, %v1691
      %v1705 = vpack.c.b16 %v1694, %v1693
      %v1706 = vpack.c.b16 %v1696, %v1695
      %v1707 = vpack.c.b16 %v1698, %v1697
      %v1708 = vpack.c.b16 %v1700, %v1699
      %1717 = vmatprep.subr.bf16.mxu0 0
      %1718 = vmatpush1.bf16.msra.mxu0 %v1701
      %1719 = vmatprep.subr.bf16.mxu0 0
      %1720 = vmatpush1.bf16.msra.mxu0 %v1702
      %1721 = vmatprep.subr.bf16.mxu0 0
      %1722 = vmatpush1.bf16.msra.mxu0 %v1703
      %1723 = vmatprep.subr.bf16.mxu0 0
      %1724 = vmatpush1.bf16.msra.mxu0 %v1704
      %1725 = vmatprep.subr.bf16.mxu0 0
      %1726 = vmatpush1.bf16.msra.mxu0 %v1705
      %1727 = vmatprep.subr.bf16.mxu0 0
      %1728 = vmatpush1.bf16.msra.mxu0 %v1706
      %1729 = vmatprep.subr.bf16.mxu0 0
      %1730 = vmatpush1.bf16.msra.mxu0 %v1707
      %1731 = vmatprep.subr.bf16.mxu0 0
      %1732 = vmatpush1.bf16.msra.mxu0 %v1708
      %1733 = vmatprep.subr.bf16.mxu0 0
      %1734 = vmatpush1.bf16.msra.mxu0 0
      %1735 = vmatprep.subr.bf16.mxu0 0
      %1736 = vmatpush1.bf16.msra.mxu0 0
      %1737 = vmatprep.subr.bf16.mxu0 0
      %1738 = vmatpush1.bf16.msra.mxu0 0
      %1739 = vmatprep.subr.bf16.mxu0 0
      %1740 = vmatpush1.bf16.msra.mxu0 0
      %1741 = vmatprep.subr.bf16.mxu0 0
      %1742 = vmatpush1.bf16.msra.mxu0 0
      %1743 = vmatprep.subr.bf16.mxu0 0
      %1744 = vmatpush1.bf16.msra.mxu0 0
      %1745 = vmatprep.subr.bf16.mxu0 0
      %1746 = vmatpush1.bf16.msra.mxu0 0
      %1747 = vmatprep.subr.bf16.mxu0 0
      %1748 = vmatpush1.bf16.msra.mxu0 0
      %1749 = vmatprep.mubr.bf16.mxu0 0
      %1750 = vmatmul.mubr.bf16.gmra.mrb[0].mxu0 %v1645
      %v1751 = vpop.f32.mrb[0].mxu0
      %v1752 = vadd.f32 %v1668, %v1751
      %v1753 = vpop.f32.mrb[0].mxu0
      %v1754 = vpop.f32.mrb[0].mxu0
      %v1755 = vadd.f32 %v1668, %v1754
      %v1756 = vpop.f32.mrb[0].mxu0
      %1757 = vmatprep.mubr.bf16.mxu0 0
      %1758 = vmatmul.mubr.bf16.gmra.mrb[0].mxu0 %v1646
      %v1759 = vpop.f32.mrb[0].mxu0
      %v1760 = vadd.f32 %v1668, %v1759
      %v1761 = vpop.f32.mrb[0].mxu0
      %v1762 = vpop.f32.mrb[0].mxu0
      %v1763 = vadd.f32 %v1668, %v1762
      %v1764 = vpop.f32.mrb[0].mxu0
      %1765 = vmatprep.mubr.bf16.mxu0 0
      %1766 = vmatmul.mubr.bf16.gmra.mrb[0].mxu0 %v1647
      %v1767 = vpop.f32.mrb[0].mxu0
      %v1768 = vadd.f32 %v1668, %v1767
      %v1769 = vpop.f32.mrb[0].mxu0
      %v1770 = vpop.f32.mrb[0].mxu0
      %v1771 = vadd.f32 %v1668, %v1770
      %v1772 = vpop.f32.mrb[0].mxu0
      %1773 = vmatprep.mubr.bf16.mxu0 0
      %1774 = vmatmul.mubr.bf16.gmra.mrb[0].mxu0 %v1648
      %v1775 = vpop.f32.mrb[0].mxu0
      %v1776 = vadd.f32 %v1668, %v1775
      %v1777 = vpop.f32.mrb[0].mxu0
      %v1778 = vpop.f32.mrb[0].mxu0
      %v1779 = vadd.f32 %v1668, %v1778
      %v1780 = vpop.f32.mrb[0].mxu0
      %1781 = vmatprep.mubr.bf16.mxu0 0
      %1782 = vmatmul.mubr.bf16.gmra.mrb[0].mxu0 %v1649
      %v1783 = vpop.f32.mrb[0].mxu0
      %v1784 = vadd.f32 %v1668, %v1783
      %v1785 = vpop.f32.mrb[0].mxu0
      %v1786 = vpop.f32.mrb[0].mxu0
      %v1787 = vadd.f32 %v1668, %v1786
      %v1788 = vpop.f32.mrb[0].mxu0
      %1789 = vmatprep.mubr.bf16.mxu0 0
      %1790 = vmatmul.mubr.bf16.gmra.mrb[0].mxu0 %v1650
      %v1791 = vpop.f32.mrb[0].mxu0
      %v1792 = vadd.f32 %v1668, %v1791
      %v1793 = vpop.f32.mrb[0].mxu0
      %v1794 = vpop.f32.mrb[0].mxu0
      %v1795 = vadd.f32 %v1668, %v1794
      %v1796 = vpop.f32.mrb[0].mxu0
      %1797 = vmatprep.mubr.bf16.mxu0 0
      %1798 = vmatmul.mubr.bf16.gmra.mrb[0].mxu0 %v1651
      %v1799 = vpop.f32.mrb[0].mxu0
      %v1800 = vadd.f32 %v1668, %v1799
      %v1801 = vpop.f32.mrb[0].mxu0
      %v1802 = vpop.f32.mrb[0].mxu0
      %v1803 = vpop.f32.mrb[0].mxu0
      %1804 = vdwg.mxu0
      %v1805 = vmax.f32 %v1752, 0.0
      %v1806 = vmax.f32 %v1755, 0.0
      %v1807 = vmax.f32 %v1760, 0.0
      %v1808 = vmax.f32 %v1763, 0.0
      %v1809 = vmax.f32 %v1768, 0.0
      %v1810 = vmax.f32 %v1771, 0.0
      %v1811 = vmax.f32 %v1776, 0.0
      %v1812 = vmax.f32 %v1779, 0.0
      %v1813 = vmax.f32 %v1784, 0.0
      %v1814 = vmax.f32 %v1787, 0.0
      %v1815 = vmax.f32 %v1792, 0.0
      %v1816 = vmax.f32 %v1795, 0.0
      %v1817 = vmax.f32 %v1800, 0.0
      %v1818 = vld [vmem:[%s4 + $0x3] ss:$0 sm:$0xff]
      %v1819 = vld [vmem:[%s4 + $0x4] ss:$0 sm:$0xff]
      %v1820 = vmul.f32 %v1805, %v1818
      %v1821 = vmul.f32 %v1806, %v1818
      %v1822 = vmul.f32 %v1807, %v1818
      %v1823 = vmul.f32 %v1808, %v1818
      %v1824 = vmul.f32 %v1809, %v1818
      %v1825 = vmul.f32 %v1810, %v1818
      %v1826 = vmul.f32 %v1811, %v1818
      %v1827 = vmul.f32 %v1812, %v1818
      %v1828 = vmul.f32 %v1813, %v1818
      %v1829 = vmul.f32 %v1814, %v1818
      %v1830 = vmul.f32 %v1815, %v1818
      %v1831 = vmul.f32 %v1816, %v1818
      %v1832 = vmul.f32 %v1817, %v1818
      %vm1833 = vcmask 523264
      %v1834 = vsel %vm1833, %v1820, 0.0
      %1835 = vadd.xlane.f32.xlu0 %v1834
      %v1836 = vpop.xlane.xlu0 %1835
      %v1837 = vsel %vm1833, %v1821, 0.0
      %1838 = vadd.xlane.f32.xlu0 %v1837
      %v1839 = vpop.xlane.xlu0 %1838
      %v1840 = vsel %vm1833, %v1822, 0.0
      %1841 = vadd.xlane.f32.xlu0 %v1840
      %v1842 = vpop.xlane.xlu0 %1841
      %v1843 = vsel %vm1833, %v1823, 0.0
      %1844 = vadd.xlane.f32.xlu0 %v1843
      %v1845 = vpop.xlane.xlu0 %1844
      %v1846 = vsel %vm1833, %v1824, 0.0
      %1847 = vadd.xlane.f32.xlu0 %v1846
      %v1848 = vpop.xlane.xlu0 %1847
      %v1849 = vsel %vm1833, %v1825, 0.0
      %1850 = vadd.xlane.f32.xlu0 %v1849
      %v1851 = vpop.xlane.xlu0 %1850
      %v1852 = vsel %vm1833, %v1826, 0.0
      %1853 = vadd.xlane.f32.xlu0 %v1852
      %v1854 = vpop.xlane.xlu0 %1853
      %v1855 = vsel %vm1833, %v1827, 0.0
      %1856 = vadd.xlane.f32.xlu0 %v1855
      %v1857 = vpop.xlane.xlu0 %1856
      %v1858 = vsel %vm1833, %v1828, 0.0
      %1859 = vadd.xlane.f32.xlu0 %v1858
      %v1860 = vpop.xlane.xlu0 %1859
      %v1861 = vsel %vm1833, %v1829, 0.0
      %1862 = vadd.xlane.f32.xlu0 %v1861
      %v1863 = vpop.xlane.xlu0 %1862
      %v1864 = vsel %vm1833, %v1830, 0.0
      %1865 = vadd.xlane.f32.xlu0 %v1864
      %v1866 = vpop.xlane.xlu0 %1865
      %v1867 = vsel %vm1833, %v1831, 0.0
      %1868 = vadd.xlane.f32.xlu0 %v1867
      %v1869 = vpop.xlane.xlu0 %1868
      %v1870 = vsel %vm1833, %v1832, 0.0
      %1871 = vadd.xlane.f32.xlu0 %v1870
      %v1872 = vpop.xlane.xlu0 %1871
      %v1873 = vadd.f32 %v1836, %v1819
      %v1874 = vadd.f32 %v1839, %v1819
      %v1875 = vadd.f32 %v1842, %v1819
      %v1876 = vadd.f32 %v1845, %v1819
      %v1877 = vadd.f32 %v1848, %v1819
      %v1878 = vadd.f32 %v1851, %v1819
      %v1879 = vadd.f32 %v1854, %v1819
      %v1880 = vadd.f32 %v1857, %v1819
      %v1881 = vadd.f32 %v1860, %v1819
      %v1882 = vadd.f32 %v1863, %v1819
      %v1883 = vadd.f32 %v1866, %v1819
      %v1884 = vadd.f32 %v1869, %v1819
      %v1885 = vadd.f32 %v1872, %v1819
      %vm1886 = vcmask 7168
      %1887 = vst.msk [vmem:[%s229] sm:$0xff] %vm1886, %v1873
      %1888 = vst.msk [vmem:[%s229 + $0x8] sm:$0xff] %vm1886, %v1874
      %1889 = vst.msk [vmem:[%s229 + $0x10] sm:$0xff] %vm1886, %v1875
      %1890 = vst.msk [vmem:[%s229 + $0x18] sm:$0xff] %vm1886, %v1876
      %1891 = vst.msk [vmem:[%s229 + $0x20] sm:$0xff] %vm1886, %v1877
      %1892 = vst.msk [vmem:[%s229 + $0x28] sm:$0xff] %vm1886, %v1878
      %1893 = vst.msk [vmem:[%s229 + $0x30] sm:$0xff] %vm1886, %v1879
      %1894 = vst.msk [vmem:[%s229 + $0x38] sm:$0xff] %vm1886, %v1880
      %1895 = vst.msk [vmem:[%s229 + $0x40] sm:$0xff] %vm1886, %v1881
      %1896 = vst.msk [vmem:[%s229 + $0x48] sm:$0xff] %vm1886, %v1882
      %1897 = vst.msk [vmem:[%s229 + $0x50] sm:$0xff] %vm1886, %v1883
      %1898 = vst.msk [vmem:[%s229 + $0x58] sm:$0xff] %vm1886, %v1884
      %1899 = vst.msk [vmem:[%s229 + $0x60] sm:$0xff] %vm1886, %v1885
      %s1900 = smul.u32 13, %s16
      %p1901 = scmp.lt.s32.totalorder %s1900, 25
      %s1902 = scalar_select %p1901, %s1900, 25
      %s1903 = smul.addr %s1902, 8
      %s1904 = scalar_lea.vmem %s5, %s1903
      // Predicated region
      $region41: #{tpu_custom_call.1} parent=39 // pred_check
        %p1905 = pneg %p144
      $region42: #{tpu_custom_call.1} parent=39 // pred_check_branch
        %1907 = sbr.rel (%p1905) target = $region44
      $region43: #{tpu_custom_call.1} parent=39 // pred_region
        %s1908 = smul.u32 13, %s16
      $region44: #{tpu_custom_call.1} parent=39 // pred_fallthru
        _
    $region40: #{tpu_custom_call.1} parent=5 // pred_fallthru
      _
    %p1909 = scmp.le.s32.totalorder 2, %s11
    // Predicated region
    $region45: #{tpu_custom_call.1} parent=5 // pred_check
      %p1910 = pneg %p1909
    $region46: #{tpu_custom_call.1} parent=5 // pred_check_branch
      %1912 = sbr.rel (%p1910) target = $region48
    $region47: #{tpu_custom_call.1} parent=5 // pred_region
      %s1913 = ssub.s32 %s11, 2
      // Predicated region
      $region49: #{tpu_custom_call.1} parent=47 // pred_check
        %p1914 = pneg %p150
      $region50: #{tpu_custom_call.1} parent=47 // pred_check_branch
        %1916 = sbr.rel (%p1914) target = $region52
      $region51: #{tpu_custom_call.1} parent=47 // pred_region
        %s1917 = smul.u32 13, %s17
        %p1918 = scmp.lt.s32.totalorder %s1917, 25
        %s1919 = scalar_select %p1918, %s1917, 25
        %s1920 = smul.addr %s1919, 8
        %s1921 = scalar_lea.vmem %s5, %s1920
      $region52: #{tpu_custom_call.1} parent=47 // pred_fallthru
        _
    $region48: #{tpu_custom_call.1} parent=5 // pred_fallthru
      _
  $region6: #{tpu_custom_call.1} parent=0 // loop_footer
    %s15 = sadd.s32 1, %s11
  $region7: #{tpu_custom_call.1} parent=0 // loop_footer_branch
    %10 = sbr.rel target = $region3
  $region8: #{tpu_custom_call.1} parent=0 // loop_exit
    _

</llo_original>
